<compile_context>
chip_gen: v6e
topology: v6e:2x2x1
jax: 0.10.0
libtpu: 0.0.40
codegen_flags: <defaults>
</compile_context>

<pallas_src>
import math
from functools import partial

import jax
import jax.numpy as jnp
from jax.experimental import pallas as pl
from jax.experimental.pallas import tpu as pltpu


# ---------------------------------------------------------------------------
# helpers
# ---------------------------------------------------------------------------

def _largest_divisor(dim, target, mult):
    """Largest divisor of `dim` that is <= target and a multiple of `mult`.

    Falls back to the full dim only when no such divisor exists (rare, odd
    shapes).  Used for dimensions that must tile exactly (reduction axes)."""
    if dim <= target:
        return dim
    d = (target // mult) * mult
    while d >= mult:
        if dim % d == 0:
            return d
        d -= mult
    return dim


_VMEM_LIMIT_CACHE = [None]


def _vmem_limit_bytes():
    """Per-generation VMEM budget: physical capacity minus headroom for
    compiler-internal scratch, clamped to a sane range."""
    if _VMEM_LIMIT_CACHE[0] is None:
        cap = None
        try:
            info = pltpu.get_tpu_info()
            cap = getattr(info, "vmem_capacity_bytes", None)
        except Exception:
            cap = None
        if not cap:
            limit = 48 * 1024 * 1024          # safe everywhere (incl. v7x 64 MiB)
        else:
            limit = int(cap) - 12 * 1024 * 1024
            limit = max(32 * 1024 * 1024, min(limit, 112 * 1024 * 1024))
        _VMEM_LIMIT_CACHE[0] = limit
    return _VMEM_LIMIT_CACHE[0]


# ---------------------------------------------------------------------------
# LayerNorm (torch.std => unbiased, divide by d-1; eps added to std)
# ---------------------------------------------------------------------------

def _norm_kernel(x_ref, alpha_ref, bias_ref, o_ref, *, eps):
    x = x_ref[...].astype(jnp.float32)          # (tile_rows, d)
    d = x.shape[-1]
    mean = jnp.mean(x, axis=-1, keepdims=True)
    xc = x - mean
    # two-pass variance: data is already in VMEM, avoids cancellation.
    var = jnp.sum(xc * xc, axis=-1, keepdims=True) / jnp.float32(d - 1)
    inv = pl.reciprocal(jnp.sqrt(var) + eps, approx=True)   # EUP slot, ~free
    alpha = alpha_ref[...].astype(jnp.float32)  # (1, d)
    bias = bias_ref[...].astype(jnp.float32)    # (1, d)
    o_ref[...] = (xc * (alpha * inv) + bias).astype(o_ref.dtype)


def layer_norm_pallas(x2d, alpha, bias, eps=1e-6):
    """x2d: [rows, d]; alpha, bias: [d]."""
    rows, d = x2d.shape
    # Keep the double-buffered in+out blocks to a few MiB (matters on v7x).
    budget_rows = max(8, (4 * 1024 * 1024) // max(1, d * x2d.dtype.itemsize))
    tile_rows = min(rows, 512, budget_rows)
    if tile_rows < rows:
        tile_rows = max(8, (tile_rows // 8) * 8)
    grid = (pl.cdiv(rows, tile_rows),)          # ragged boundary rows are masked

    alpha2 = alpha.reshape(1, d)
    bias2 = bias.reshape(1, d)
    itemsize = x2d.dtype.itemsize

    return pl.pallas_call(
        partial(_norm_kernel, eps=eps),
        out_shape=jax.ShapeDtypeStruct((rows, d), x2d.dtype),
        grid_spec=pltpu.PrefetchScalarGridSpec(
            num_scalar_prefetch=0,
            grid=grid,
            in_specs=[
                pl.BlockSpec((tile_rows, d), lambda i: (i, 0)),
                pl.BlockSpec((1, d), lambda i: (0, 0)),   # resident in VMEM
                pl.BlockSpec((1, d), lambda i: (0, 0)),
            ],
            out_specs=pl.BlockSpec((tile_rows, d), lambda i: (i, 0)),
        ),
        compiler_params=pltpu.CompilerParams(
            dimension_semantics=("parallel",),
            vmem_limit_bytes=_vmem_limit_bytes(),
        ),
        cost_estimate=pl.CostEstimate(
            flops=8 * rows * d,
            transcendentals=2 * rows,
            bytes_accessed=int(2 * rows * d * itemsize + 2 * d * 4),
        ),
    )(x2d, alpha2, bias2)


# ---------------------------------------------------------------------------
# Linear: y = x @ w + b  [+ ReLU] [+ residual] [+ fused LayerNorm output]
#   (w is [in, out]); bf16 MXU operands with f32 accumulation when requested.
# ---------------------------------------------------------------------------

def _linear_kernel(*refs, activation, has_residual, norm_eps, mxu_dtype):
    has_norm = norm_eps is not None
    idx = 0
    x_ref, w_ref, b_ref = refs[0], refs[1], refs[2]
    idx = 3
    res_ref = None
    if has_residual:
        res_ref = refs[idx]; idx += 1
    if has_norm:
        na_ref, nb_ref = refs[idx], refs[idx + 1]; idx += 2
    o_ref = refs[idx]; idx += 1
    if has_norm:
        on_ref = refs[idx]; idx += 1
    acc_ref = refs[idx]

    k_idx = pl.program_id(2)

    @pl.when(k_idx == 0)
    def _():
        acc_ref[...] = jnp.zeros_like(acc_ref)

    a = x_ref[...]
    w = w_ref[...]
    if mxu_dtype is not None:
        a = a.astype(mxu_dtype)      # per-tile cast inside VMEM (no extra HBM pass)
        w = w.astype(mxu_dtype)      # no-op when weights were pre-cast
    acc_ref[...] += jnp.dot(a, w, preferred_element_type=jnp.float32)

    @pl.when(k_idx == pl.num_programs(2) - 1)
    def _():
        out = acc_ref[...] + b_ref[...].astype(jnp.float32)
        if activation == "relu":
            out = jnp.maximum(out, 0.0)
        if has_residual:
            out = out + res_ref[...].astype(jnp.float32)
        o_ref[...] = out.astype(o_ref.dtype)
        if has_norm:
            # tn == N here, so the full row is live: fuse the following LayerNorm.
            d = out.shape[-1]
            mean = jnp.mean(out, axis=-1, keepdims=True)
            xc = out - mean
            var = jnp.sum(xc * xc, axis=-1, keepdims=True) / jnp.float32(d - 1)
            inv = pl.reciprocal(jnp.sqrt(var) + norm_eps, approx=True)
            alpha = na_ref[...].astype(jnp.float32)
            nb = nb_ref[...].astype(jnp.float32)
            on_ref[...] = (xc * (alpha * inv) + nb).astype(on_ref.dtype)


def linear_pallas(x, w, b, activation=None, residual=None, norm_params=None,
                  mxu_dtype=None, tm_target=512, tk_target=512, tn_target=512):
    """x: [M, K], w: [K, N], b: [N]; optional residual [M, N].
    norm_params=(alpha, bias, eps) fuses a LayerNorm over the result rows and
    returns (y, norm(y)) — requires tn == N (enforced here)."""
    M, K = x.shape
    K2, N = w.shape
    assert K == K2

    tm = M if M <= tm_target else tm_target                 # ragged M blocks are masked
    tk = _largest_divisor(K, tk_target, 128)                 # reduction axis must divide
    if norm_params is not None:
        tn = N                                               # full rows for fused norm
        row_cap = max(8, ((4 * 1024 * 1024) // max(1, N * 4)) // 8 * 8)
        tm = min(tm, row_cap)
    else:
        tn = N if N <= tn_target else tn_target
    grid = (pl.cdiv(M, tm), pl.cdiv(N, tn), K // tk)

    b2 = b.reshape(1, N)
    inputs = [x, w, b2]
    in_specs = [
        pl.BlockSpec((tm, tk), lambda i, j, k: (i, k)),
        pl.BlockSpec((tk, tn), lambda i, j, k: (k, j)),
        pl.BlockSpec((1, tn), lambda i, j, k: (0, j)),
    ]
    if residual is not None:
        inputs.append(residual)
        in_specs.append(pl.BlockSpec((tm, tn), lambda i, j, k: (i, j)))
    norm_eps = None
    if norm_params is not None:
        n_alpha, n_bias, norm_eps = norm_params
        inputs += [n_alpha.reshape(1, N), n_bias.reshape(1, N)]
        in_specs += [pl.BlockSpec((1, tn), lambda i, j, k: (0, j)),
                     pl.BlockSpec((1, tn), lambda i, j, k: (0, j))]

    if norm_params is not None:
        out_shape = (jax.ShapeDtypeStruct((M, N), x.dtype),
                     jax.ShapeDtypeStruct((M, N), x.dtype))
        out_specs = (pl.BlockSpec((tm, tn), lambda i, j, k: (i, j)),
                     pl.BlockSpec((tm, tn), lambda i, j, k: (i, j)))
    else:
        out_shape = jax.ShapeDtypeStruct((M, N), x.dtype)
        out_specs = pl.BlockSpec((tm, tn), lambda i, j, k: (i, j))

    it_x = x.dtype.itemsize
    bytes_accessed = (M * K * it_x + K * N * w.dtype.itemsize + N * 4
                      + M * N * it_x
                      + (M * N * it_x if residual is not None else 0)
                      + (M * N * it_x if norm_params is not None else 0))

    return pl.pallas_call(
        partial(_linear_kernel, activation=activation,
                has_residual=residual is not None,
                norm_eps=norm_eps, mxu_dtype=mxu_dtype),
        out_shape=out_shape,
        grid_spec=pltpu.PrefetchScalarGridSpec(
            num_scalar_prefetch=0,
            grid=grid,
            in_specs=in_specs,
            out_specs=out_specs,
            scratch_shapes=[pltpu.VMEM((tm, tn), jnp.float32)],
        ),
        compiler_params=pltpu.CompilerParams(
            dimension_semantics=("parallel", "parallel", "arbitrary"),
            vmem_limit_bytes=_vmem_limit_bytes(),
        ),
        cost_estimate=pl.CostEstimate(
            flops=2 * M * N * K,
            transcendentals=0,
            bytes_accessed=int(bytes_accessed),
        ),
    )(*inputs)


# ---------------------------------------------------------------------------
# Flash-style multi-head attention: softmax(QK^T / sqrt(dk)) V
#   q, k, v: [B*H, S, dk]; grid (B*H, q_blocks, kv_blocks); online softmax.
# ---------------------------------------------------------------------------

def _flash_attn_kernel(q_ref, k_ref, v_ref, o_ref, m_ref, l_ref, acc_ref,
                       *, scale, mxu_dtype):
    ki = pl.program_id(2)

    @pl.when(ki == 0)
    def _():
        m_ref[...] = jnp.full_like(m_ref, -jnp.inf)
        l_ref[...] = jnp.zeros_like(l_ref)
        acc_ref[...] = jnp.zeros_like(acc_ref)

    q = q_ref[0]                     # (tq, dk)
    k = k_ref[0]                     # (tk, dk)
    v = v_ref[0]                     # (tk, dk)
    if mxu_dtype is not None:
        q = q.astype(mxu_dtype)
        k = k.astype(mxu_dtype)
        v = v.astype(mxu_dtype)

    # TODO(synk): attention mask (masked_fill with -1e9) not supported; mask=None only.
    s = jax.lax.dot_general(q, k, (((1,), (1,)), ((), ())),
                            preferred_element_type=jnp.float32) * scale   # (tq, tk)

    m_prev = m_ref[...]                                        # (tq, 1)
    m_new = jnp.maximum(m_prev, jnp.max(s, axis=-1, keepdims=True))
    alpha = jnp.exp(m_prev - m_new)
    p = jnp.exp(s - m_new)                                     # f32 probs
    pv = jax.lax.dot_general(p.astype(v.dtype), v, (((1,), (0,)), ((), ())),
                             preferred_element_type=jnp.float32)          # (tq, dk)

    l_ref[...] = alpha * l_ref[...] + jnp.sum(p, axis=-1, keepdims=True)
    acc_ref[...] = alpha * acc_ref[...] + pv
    m_ref[...] = m_new

    @pl.when(ki == pl.num_programs(2) - 1)
    def _():
        o_ref[0] = (acc_ref[...] *
                    pl.reciprocal(l_ref[...], approx=True)).astype(o_ref.dtype)


def flash_attention_pallas(q, k, v, scale, mxu_dtype=None,
                           tq_target=256, tk_target=512):
    """q, k, v: [B*H, S, dk] -> [B*H, S, dk] (f32 output)."""
    BH, S, dk = q.shape
    tq = _largest_divisor(S, tq_target, 8)
    tk = _largest_divisor(S, tk_target, 8)
    grid = (BH, S // tq, S // tk)

    q_spec = pl.BlockSpec((1, tq, dk), lambda b, qi, ki: (b, qi, 0))
    kv_spec = pl.BlockSpec((1, tk, dk), lambda b, qi, ki: (b, ki, 0))
    o_spec = pl.BlockSpec((1, tq, dk), lambda b, qi, ki: (b, qi, 0))

    it_in = q.dtype.itemsize
    return pl.pallas_call(
        partial(_flash_attn_kernel, scale=scale, mxu_dtype=mxu_dtype),
        out_shape=jax.ShapeDtypeStruct((BH, S, dk), jnp.float32),
        grid_spec=pltpu.PrefetchScalarGridSpec(
            num_scalar_prefetch=0,
            grid=grid,
            in_specs=[q_spec, kv_spec, kv_spec],
            out_specs=o_spec,
            scratch_shapes=[pltpu.VMEM((tq, 1), jnp.float32),    # running max
                            pltpu.VMEM((tq, 1), jnp.float32),    # running denom
                            pltpu.VMEM((tq, dk), jnp.float32)],  # accumulator
        ),
        compiler_params=pltpu.CompilerParams(
            dimension_semantics=("parallel", "parallel", "arbitrary"),
            vmem_limit_bytes=_vmem_limit_bytes(),
        ),
        cost_estimate=pl.CostEstimate(
            flops=4 * BH * S * S * dk,
            transcendentals=BH * S * S,
            bytes_accessed=int(3 * BH * S * dk * it_in + BH * S * dk * 4),
        ),
    )(q, k, v)


# ---------------------------------------------------------------------------
# Parameter prep (hoisted off the forward critical path) and forward pass
# ---------------------------------------------------------------------------

def prepare_params(params, mxu_dtype=jnp.bfloat16):
    """Fuse QKV weights/biases once and pre-cast weight matrices for the MXU."""
    wd = mxu_dtype if mxu_dtype is not None else params["wq"].dtype
    return {
        "norm1_alpha": params["norm1_alpha"], "norm1_bias": params["norm1_bias"],
        "norm2_alpha": params["norm2_alpha"], "norm2_bias": params["norm2_bias"],
        "w_qkv": jnp.concatenate([params["wq"], params["wk"], params["wv"]],
                                 axis=1).astype(wd),
        "b_qkv": jnp.concatenate([params["bq"], params["bk"], params["bv"]], axis=0),
        "wo": params["wo"].astype(wd), "bo": params["bo"],
        "w1": params["w1"].astype(wd), "b1": params["b1"],
        "w2": params["w2"].astype(wd), "b2": params["b2"],
    }


def encoder_layer_forward(x, prep, heads, mask=None, mxu_dtype=jnp.bfloat16,
                          eps=1e-6):
    # TODO(synk): dropout_1 / dropout_2 / attn dropout / ff dropout are identity
    # (inference mode); attention mask path not implemented.
    assert mask is None
    B, S, D = x.shape
    assert D % heads == 0
    dk = D // heads
    rows = B * S
    x2d = x.reshape(rows, D)

    # --- sublayer 1: pre-norm, multi-head self-attention, residual ---
    x2 = layer_norm_pallas(x2d, prep["norm1_alpha"], prep["norm1_bias"], eps=eps)
    qkv = linear_pallas(x2, prep["w_qkv"], prep["b_qkv"], mxu_dtype=mxu_dtype)
    q, k, v = jnp.split(qkv, 3, axis=1)

    head_dtype = mxu_dtype if mxu_dtype is not None else x.dtype

    def to_heads(t):
        # TODO(synk): this [B,S,H,dk]->[B*H,S,dk] relayout (and the inverse on the
        # output) is an XLA-side HBM round trip; folding it into BlockSpecs needs
        # sub-128-lane head blocks and is left out for robustness.
        return (t.reshape(B, S, heads, dk).transpose(0, 2, 1, 3)
                 .reshape(B * heads, S, dk).astype(head_dtype))

    attn = flash_attention_pallas(to_heads(q), to_heads(k), to_heads(v),
                                  scale=1.0 / math.sqrt(dk), mxu_dtype=mxu_dtype)
    concat = (attn.reshape(B, heads, S, dk).transpose(0, 2, 1, 3)
                  .reshape(rows, D).astype(x.dtype))

    # out-projection + residual; norm_2 fused into the finalize step when feasible
    fuse_norm = D <= 8192
    if fuse_norm:
        x1, x2b = linear_pallas(
            concat, prep["wo"], prep["bo"], residual=x2d,
            norm_params=(prep["norm2_alpha"], prep["norm2_bias"], eps),
            mxu_dtype=mxu_dtype)
    else:
        x1 = linear_pallas(concat, prep["wo"], prep["bo"], residual=x2d,
                           mxu_dtype=mxu_dtype)
        x2b = layer_norm_pallas(x1, prep["norm2_alpha"], prep["norm2_bias"], eps=eps)

    # --- sublayer 2: feed-forward, residual ---
    h = linear_pallas(x2b, prep["w1"], prep["b1"], activation="relu",
                      mxu_dtype=mxu_dtype)
    out = linear_pallas(h, prep["w2"], prep["b2"], residual=x1,
                        mxu_dtype=mxu_dtype)
    return out.reshape(B, S, D)


# ---------------------------------------------------------------------------
# Pure-JAX reference (mirrors the PyTorch module, f32, highest precision)
# ---------------------------------------------------------------------------

def encoder_layer_reference(x, params, heads, eps=1e-6):
    hp = jax.lax.Precision.HIGHEST

    def norm(t, alpha, bias):
        mean = jnp.mean(t, axis=-1, keepdims=True)
        d = t.shape[-1]
        var = jnp.sum((t - mean) ** 2, axis=-1, keepdims=True) / (d - 1)
        return alpha * (t - mean) / (jnp.sqrt(var) + eps) + bias

    def lin(t, w, b):
        return jnp.matmul(t, w, precision=hp) + b

    B, S, D = x.shape
    dk = D // heads

    x2 = norm(x, params["norm1_alpha"], params["norm1_bias"])
    q = lin(x2, params["wq"], params["bq"]).reshape(B, S, heads, dk).transpose(0, 2, 1, 3)
    k = lin(x2, params["wk"], params["bk"]).reshape(B, S, heads, dk).transpose(0, 2, 1, 3)
    v = lin(x2, params["wv"], params["bv"]).reshape(B, S, heads, dk).transpose(0, 2, 1, 3)
    scores = jnp.matmul(q, jnp.swapaxes(k, -2, -1), precision=hp) / math.sqrt(dk)
    weights = jax.nn.softmax(scores, axis=-1)
    attn = jnp.matmul(weights, v, precision=hp)
    concat = attn.transpose(0, 2, 1, 3).reshape(B, S, D)
    x = x + lin(concat, params["wo"], params["bo"])

    x2 = norm(x, params["norm2_alpha"], params["norm2_bias"])
    ff = lin(jnp.maximum(lin(x2, params["w1"], params["b1"]), 0.0),
             params["w2"], params["b2"])
    return x + ff


# ---------------------------------------------------------------------------
# main
# ---------------------------------------------------------------------------

if __name__ == "__main__":
    B, S, D, H, DFF = 2, 8, 32, 4, 64

    key = jax.random.PRNGKey(0)
    keys = jax.random.split(key, 13)

    def w_init(k, shape, scale=0.1):
        return jax.random.normal(k, shape, dtype=jnp.float32) * scale

    x = jax.random.normal(keys[0], (B, S, D), dtype=jnp.float32)

    # Weights stored as [in, out] (transposed vs. PyTorch nn.Linear.weight).
    params = {
        "norm1_alpha": jnp.ones((D,), jnp.float32),
        "norm1_bias": jnp.zeros((D,), jnp.float32),
        "norm2_alpha": jnp.ones((D,), jnp.float32),
        "norm2_bias": jnp.zeros((D,), jnp.float32),
        "wq": w_init(keys[1], (D, D)), "bq": w_init(keys[2], (D,)),
        "wk": w_init(keys[3], (D, D)), "bk": w_init(keys[4], (D,)),
        "wv": w_init(keys[5], (D, D)), "bv": w_init(keys[6], (D,)),
        "wo": w_init(keys[7], (D, D)), "bo": w_init(keys[8], (D,)),
        "w1": w_init(keys[9], (D, DFF)), "b1": w_init(keys[10], (DFF,)),
        "w2": w_init(keys[11], (DFF, D)), "b2": w_init(keys[12], (D,)),
    }

    ref = encoder_layer_reference(x, params, heads=H)

    # f32 MXU path: tight numerical check against the reference.
    prep_f32 = prepare_params(params, mxu_dtype=None)
    fwd_f32 = jax.jit(partial(encoder_layer_forward, heads=H, mxu_dtype=None))
    out_f32 = jax.block_until_ready(fwd_f32(x, prep_f32))
    assert out_f32.shape == x.shape
    assert jnp.allclose(out_f32, ref, atol=5e-3, rtol=5e-3), "f32 path mismatch"

    # bf16 MXU path (default / fast on TPU): looser check (bf16 operand rounding).
    prep_bf16 = prepare_params(params, mxu_dtype=jnp.bfloat16)
    fwd_bf16 = jax.jit(partial(encoder_layer_forward, heads=H,
                               mxu_dtype=jnp.bfloat16))
    out_bf16 = jax.block_until_ready(fwd_bf16(x, prep_bf16))
    assert out_bf16.shape == x.shape
    assert jnp.allclose(out_bf16, ref, atol=4e-2, rtol=4e-2), "bf16 path mismatch"

    print("KERNEL_OK")
</pallas_src>

<mosaic_0001>
module attributes {stable_mosaic.version = 11 : i64} {
  func.func @_norm_kernel(%arg0: i32, %arg1: memref<16x32xf32, #tpu.memory_space<vmem>>, %arg2: memref<1x32xf32, #tpu.memory_space<vmem>>, %arg3: memref<1x32xf32, #tpu.memory_space<vmem>>, %arg4: memref<16x32xf32, #tpu.memory_space<vmem>>) attributes {dimension_semantics = [#tpu.dimension_semantics<parallel>], iteration_bounds = array<i64: 1>, scalar_prefetch = 0 : i64, scratch_operands = 0 : i64, tpu.core_type = #tpu.core_type<tc>, window_params = [{transform_indices = @transform_0, window_bounds = array<i64: 16, 32>}, {pipeline_mode = #tpu.pipeline_mode<synchronous>, transform_indices = @transform_1, window_bounds = array<i64: 1, 32>}, {pipeline_mode = #tpu.pipeline_mode<synchronous>, transform_indices = @transform_2, window_bounds = array<i64: 1, 32>}, {transform_indices = @transform_3, window_bounds = array<i64: 16, 32>}]} {
    %c0 = arith.constant 0 : index
    %c0_0 = arith.constant 0 : index
    %0 = vector.load %arg1[%c0, %c0_0] : memref<16x32xf32, #tpu.memory_space<vmem>>, vector<16x32xf32>
    %cst = arith.constant dense<0.000000e+00> : vector<16xf32>
    %1 = vector.multi_reduction <add>, %0, %cst [1] : vector<16x32xf32> to vector<16xf32>
    %2 = vector.shape_cast %1 : vector<16xf32> to vector<16x1xf32>
    %cst_1 = arith.constant 3.200000e+01 : f32
    %3 = vector.broadcast %cst_1 : f32 to vector<16x1xf32>
    %4 = arith.divf %2, %3 : vector<16x1xf32>
    %5 = vector.broadcast %4 : vector<16x1xf32> to vector<16x32xf32>
    %6 = arith.subf %0, %5 : vector<16x32xf32>
    %7 = arith.mulf %6, %6 : vector<16x32xf32>
    %cst_2 = arith.constant dense<0.000000e+00> : vector<16xf32>
    %8 = vector.multi_reduction <add>, %7, %cst_2 [1] : vector<16x32xf32> to vector<16xf32>
    %9 = vector.shape_cast %8 : vector<16xf32> to vector<16x1xf32>
    %cst_3 = arith.constant 3.100000e+01 : f32
    %10 = vector.broadcast %cst_3 : f32 to vector<16x1xf32>
    %11 = arith.divf %9, %10 : vector<16x1xf32>
    %12 = math.sqrt %11 : vector<16x1xf32>
    %cst_4 = arith.constant 9.99999997E-7 : f32
    %13 = vector.broadcast %cst_4 : f32 to vector<16x1xf32>
    %14 = arith.addf %12, %13 : vector<16x1xf32>
    %15 = tpu.reciprocal %14 {approx = true} : vector<16x1xf32> -> vector<16x1xf32>
    %c0_5 = arith.constant 0 : index
    %c0_6 = arith.constant 0 : index
    %16 = vector.load %arg2[%c0_5, %c0_6] : memref<1x32xf32, #tpu.memory_space<vmem>>, vector<1x32xf32>
    %c0_7 = arith.constant 0 : index
    %c0_8 = arith.constant 0 : index
    %17 = vector.load %arg3[%c0_7, %c0_8] : memref<1x32xf32, #tpu.memory_space<vmem>>, vector<1x32xf32>
    %18 = vector.broadcast %16 : vector<1x32xf32> to vector<16x32xf32>
    %19 = vector.broadcast %15 : vector<16x1xf32> to vector<16x32xf32>
    %20 = arith.mulf %18, %19 : vector<16x32xf32>
    %21 = arith.mulf %6, %20 : vector<16x32xf32>
    %22 = vector.broadcast %17 : vector<1x32xf32> to vector<16x32xf32>
    %23 = arith.addf %21, %22 : vector<16x32xf32>
    %c0_9 = arith.constant 0 : index
    %c0_10 = arith.constant 0 : index
    %24 = vector.load %arg4[%c0_9, %c0_10] : memref<16x32xf32, #tpu.memory_space<vmem>>, vector<16x32xf32>
    tpu.vector_store %arg4[%c0_9, %c0_10], %23 {strides = array<i32>} : memref<16x32xf32, #tpu.memory_space<vmem>>, vector<16x32xf32>,
    return
  }
  func.func @transform_0(%arg0: i32) -> (i32, i32) {
    %c0_i32 = arith.constant 0 : i32
    %c0_i32_0 = arith.constant 0 : i32
    return %arg0, %c0_i32 : i32, i32
  }
  func.func @transform_1(%arg0: i32) -> (i32, i32) {
    %c0_i32 = arith.constant 0 : i32
    %c0_i32_0 = arith.constant 0 : i32
    %c0_i32_1 = arith.constant 0 : i32
    return %c0_i32, %c0_i32_0 : i32, i32
  }
  func.func @transform_2(%arg0: i32) -> (i32, i32) {
    %c0_i32 = arith.constant 0 : i32
    %c0_i32_0 = arith.constant 0 : i32
    %c0_i32_1 = arith.constant 0 : i32
    return %c0_i32, %c0_i32_0 : i32, i32
  }
  func.func @transform_3(%arg0: i32) -> (i32, i32) {
    %c0_i32 = arith.constant 0 : i32
    %c0_i32_0 = arith.constant 0 : i32
    return %arg0, %c0_i32 : i32, i32
  }
}

module attributes {stable_mosaic.version = 11 : i64} {
  func.func @_linear_kernel(%arg0: i32, %arg1: i32, %arg2: i32, %arg3: memref<16x32xf32, #tpu.memory_space<vmem>>, %arg4: memref<32x96xf32, #tpu.memory_space<vmem>>, %arg5: memref<1x96xf32, #tpu.memory_space<vmem>>, %arg6: memref<16x96xf32, #tpu.memory_space<vmem>>, %arg7: memref<16x96xf32, #tpu.memory_space<vmem>>) attributes {dimension_semantics = [#tpu.dimension_semantics<parallel>, #tpu.dimension_semantics<parallel>, #tpu.dimension_semantics<arbitrary>], iteration_bounds = array<i64: 1, 1, 1>, scalar_prefetch = 0 : i64, scratch_operands = 1 : i64, tpu.core_type = #tpu.core_type<tc>, window_params = [{transform_indices = @transform_0, window_bounds = array<i64: 16, 32>}, {transform_indices = @transform_1, window_bounds = array<i64: 32, 96>}, {transform_indices = @transform_2, window_bounds = array<i64: 1, 96>}, {transform_indices = @transform_3, window_bounds = array<i64: 16, 96>}]} {
    %c0_i32 = arith.constant 0 : i32
    %0 = arith.cmpi eq, %arg2, %c0_i32 : i32
    %1 = arith.extui %0 : i1 to i32
    %c0_i32_0 = arith.constant 0 : i32
    %2 = arith.cmpi ne, %1, %c0_i32_0 : i32
    scf.if %2 {
      %cst_10 = arith.constant 0.000000e+00 : f32
      %12 = vector.broadcast %cst_10 : f32 to vector<16x96xf32>
      %c0_11 = arith.constant 0 : index
      %c0_12 = arith.constant 0 : index
      %13 = vector.load %arg7[%c0_11, %c0_12] : memref<16x96xf32, #tpu.memory_space<vmem>>, vector<16x96xf32>
      tpu.vector_store %arg7[%c0_11, %c0_12], %12 {strides = array<i32>} : memref<16x96xf32, #tpu.memory_space<vmem>>, vector<16x96xf32>,
    } else {
    }
    %c0 = arith.constant 0 : index
    %c0_1 = arith.constant 0 : index
    %3 = vector.load %arg3[%c0, %c0_1] : memref<16x32xf32, #tpu.memory_space<vmem>>, vector<16x32xf32>
    %c0_2 = arith.constant 0 : index
    %c0_3 = arith.constant 0 : index
    %4 = vector.load %arg4[%c0_2, %c0_3] : memref<32x96xf32, #tpu.memory_space<vmem>>, vector<32x96xf32>
    %c0_4 = arith.constant 0 : index
    %c0_5 = arith.constant 0 : index
    %5 = vector.load %arg7[%c0_4, %c0_5] : memref<16x96xf32, #tpu.memory_space<vmem>>, vector<16x96xf32>
    %cst = arith.constant dense<0.000000e+00> : vector<16x96xf32>
    %6 = tpu.matmul %3, %4, %cst {dimension_numbers = #tpu.dot_dimension_numbers<[1], [0], [0], [1], [0, 0, 1, 1], [], []>} : vector<16x32xf32>, vector<32x96xf32>, vector<16x96xf32> -> vector<16x96xf32>
    %7 = arith.addf %5, %6 : vector<16x96xf32>
    %c0_6 = arith.constant 0 : index
    %c0_7 = arith.constant 0 : index
    %8 = vector.load %arg7[%c0_6, %c0_7] : memref<16x96xf32, #tpu.memory_space<vmem>>, vector<16x96xf32>
    tpu.vector_store %arg7[%c0_6, %c0_7], %7 {strides = array<i32>} : memref<16x96xf32, #tpu.memory_space<vmem>>, vector<16x96xf32>,
    %c0_i32_8 = arith.constant 0 : i32
    %9 = arith.cmpi eq, %arg2, %c0_i32_8 : i32
    %10 = arith.extui %9 : i1 to i32
    %c0_i32_9 = arith.constant 0 : i32
    %11 = arith.cmpi ne, %10, %c0_i32_9 : i32
    scf.if %11 {
      %c0_10 = arith.constant 0 : index
      %c0_11 = arith.constant 0 : index
      %12 = vector.load %arg7[%c0_10, %c0_11] : memref<16x96xf32, #tpu.memory_space<vmem>>, vector<16x96xf32>
      %c0_12 = arith.constant 0 : index
      %c0_13 = arith.constant 0 : index
      %13 = vector.load %arg5[%c0_12, %c0_13] : memref<1x96xf32, #tpu.memory_space<vmem>>, vector<1x96xf32>
      %14 = vector.broadcast %13 : vector<1x96xf32> to vector<16x96xf32>
      %15 = arith.addf %12, %14 : vector<16x96xf32>
      %c0_14 = arith.constant 0 : index
      %c0_15 = arith.constant 0 : index
      %16 = vector.load %arg6[%c0_14, %c0_15] : memref<16x96xf32, #tpu.memory_space<vmem>>, vector<16x96xf32>
      tpu.vector_store %arg6[%c0_14, %c0_15], %15 {strides = array<i32>} : memref<16x96xf32, #tpu.memory_space<vmem>>, vector<16x96xf32>,
    } else {
    }
    return
  }
  func.func @transform_0(%arg0: i32, %arg1: i32, %arg2: i32) -> (i32, i32) {
    %c0_i32 = arith.constant 0 : i32
    return %arg0, %arg2 : i32, i32
  }
  func.func @transform_1(%arg0: i32, %arg1: i32, %arg2: i32) -> (i32, i32) {
    %c0_i32 = arith.constant 0 : i32
    return %arg2, %arg1 : i32, i32
  }
  func.func @transform_2(%arg0: i32, %arg1: i32, %arg2: i32) -> (i32, i32) {
    %c0_i32 = arith.constant 0 : i32
    %c0_i32_0 = arith.constant 0 : i32
    return %c0_i32, %arg1 : i32, i32
  }
  func.func @transform_3(%arg0: i32, %arg1: i32, %arg2: i32) -> (i32, i32) {
    %c0_i32 = arith.constant 0 : i32
    return %arg0, %arg1 : i32, i32
  }
}

module attributes {stable_mosaic.version = 11 : i64} {
  func.func @_flash_attn_kernel(%arg0: i32, %arg1: i32, %arg2: i32, %arg3: memref<1x8x8xf32, #tpu.memory_space<vmem>>, %arg4: memref<1x8x8xf32, #tpu.memory_space<vmem>>, %arg5: memref<1x8x8xf32, #tpu.memory_space<vmem>>, %arg6: memref<1x8x8xf32, #tpu.memory_space<vmem>>, %arg7: memref<8x1xf32, #tpu.memory_space<vmem>>, %arg8: memref<8x1xf32, #tpu.memory_space<vmem>>, %arg9: memref<8x8xf32, #tpu.memory_space<vmem>>) attributes {dimension_semantics = [#tpu.dimension_semantics<parallel>, #tpu.dimension_semantics<parallel>, #tpu.dimension_semantics<arbitrary>], iteration_bounds = array<i64: 8, 1, 1>, scalar_prefetch = 0 : i64, scratch_operands = 3 : i64, tpu.core_type = #tpu.core_type<tc>, window_params = [{transform_indices = @transform_0, window_bounds = array<i64: 1, 8, 8>}, {transform_indices = @transform_1, window_bounds = array<i64: 1, 8, 8>}, {transform_indices = @transform_2, window_bounds = array<i64: 1, 8, 8>}, {transform_indices = @transform_3, window_bounds = array<i64: 1, 8, 8>}]} {
    %c0_i32 = arith.constant 0 : i32
    %0 = arith.cmpi eq, %arg2, %c0_i32 : i32
    %1 = arith.extui %0 : i1 to i32
    %c0_i32_0 = arith.constant 0 : i32
    %2 = arith.cmpi ne, %1, %c0_i32_0 : i32
    scf.if %2 {
      %cst_27 = arith.constant 0xFF800000 : f32
      %37 = vector.broadcast %cst_27 : f32 to vector<8x1xf32>
      %c0_28 = arith.constant 0 : index
      %c0_29 = arith.constant 0 : index
      %38 = vector.load %arg7[%c0_28, %c0_29] : memref<8x1xf32, #tpu.memory_space<vmem>>, vector<8x1xf32>
      tpu.vector_store %arg7[%c0_28, %c0_29], %37 {strides = array<i32>} : memref<8x1xf32, #tpu.memory_space<vmem>>, vector<8x1xf32>,
      %cst_30 = arith.constant 0.000000e+00 : f32
      %39 = vector.broadcast %cst_30 : f32 to vector<8x1xf32>
      %c0_31 = arith.constant 0 : index
      %c0_32 = arith.constant 0 : index
      %40 = vector.load %arg8[%c0_31, %c0_32] : memref<8x1xf32, #tpu.memory_space<vmem>>, vector<8x1xf32>
      tpu.vector_store %arg8[%c0_31, %c0_32], %39 {strides = array<i32>} : memref<8x1xf32, #tpu.memory_space<vmem>>, vector<8x1xf32>,
      %cst_33 = arith.constant 0.000000e+00 : f32
      %41 = vector.broadcast %cst_33 : f32 to vector<8x8xf32>
      %c0_34 = arith.constant 0 : index
      %c0_35 = arith.constant 0 : index
      %42 = vector.load %arg9[%c0_34, %c0_35] : memref<8x8xf32, #tpu.memory_space<vmem>>, vector<8x8xf32>
      tpu.vector_store %arg9[%c0_34, %c0_35], %41 {strides = array<i32>} : memref<8x8xf32, #tpu.memory_space<vmem>>, vector<8x8xf32>,
    } else {
    }
    %c0 = arith.constant 0 : index
    %c0_1 = arith.constant 0 : index
    %c0_2 = arith.constant 0 : index
    %3 = vector.load %arg3[%c0, %c0_1, %c0_2] : memref<1x8x8xf32, #tpu.memory_space<vmem>>, vector<1x8x8xf32>
    %4 = vector.shape_cast %3 : vector<1x8x8xf32> to vector<8x8xf32>
    %c0_3 = arith.constant 0 : index
    %c0_4 = arith.constant 0 : index
    %c0_5 = arith.constant 0 : index
    %5 = vector.load %arg4[%c0_3, %c0_4, %c0_5] : memref<1x8x8xf32, #tpu.memory_space<vmem>>, vector<1x8x8xf32>
    %6 = vector.shape_cast %5 : vector<1x8x8xf32> to vector<8x8xf32>
    %c0_6 = arith.constant 0 : index
    %c0_7 = arith.constant 0 : index
    %c0_8 = arith.constant 0 : index
    %7 = vector.load %arg5[%c0_6, %c0_7, %c0_8] : memref<1x8x8xf32, #tpu.memory_space<vmem>>, vector<1x8x8xf32>
    %8 = vector.shape_cast %7 : vector<1x8x8xf32> to vector<8x8xf32>
    %cst = arith.constant dense<0.000000e+00> : vector<8x8xf32>
    %9 = tpu.matmul %4, %6, %cst {dimension_numbers = #tpu.dot_dimension_numbers<[1], [1], [0], [0], [0, 0, 1, 0], [], []>} : vector<8x8xf32>, vector<8x8xf32>, vector<8x8xf32> -> vector<8x8xf32>
    %cst_9 = arith.constant 0.353553385 : f32
    %10 = vector.broadcast %cst_9 : f32 to vector<8x8xf32>
    %11 = arith.mulf %9, %10 : vector<8x8xf32>
    %c0_10 = arith.constant 0 : index
    %c0_11 = arith.constant 0 : index
    %12 = vector.load %arg7[%c0_10, %c0_11] : memref<8x1xf32, #tpu.memory_space<vmem>>, vector<8x1xf32>
    %cst_12 = arith.constant dense<0xFF800000> : vector<8xf32>
    %13 = vector.multi_reduction <maximumf>, %11, %cst_12 [1] : vector<8x8xf32> to vector<8xf32>
    %14 = vector.shape_cast %13 : vector<8xf32> to vector<8x1xf32>
    %15 = arith.maximumf %12, %14 : vector<8x1xf32>
    %16 = arith.subf %12, %15 : vector<8x1xf32>
    %17 = math.exp %16 : vector<8x1xf32>
    %18 = vector.broadcast %15 : vector<8x1xf32> to vector<8x8xf32>
    %19 = arith.subf %11, %18 : vector<8x8xf32>
    %20 = math.exp %19 : vector<8x8xf32>
    %cst_13 = arith.constant dense<0.000000e+00> : vector<8x8xf32>
    %21 = tpu.matmul %20, %8, %cst_13 {dimension_numbers = #tpu.dot_dimension_numbers<[1], [0], [0], [1], [0, 0, 1, 1], [], []>} : vector<8x8xf32>, vector<8x8xf32>, vector<8x8xf32> -> vector<8x8xf32>
    %c0_14 = arith.constant 0 : index
    %c0_15 = arith.constant 0 : index
    %22 = vector.load %arg8[%c0_14, %c0_15] : memref<8x1xf32, #tpu.memory_space<vmem>>, vector<8x1xf32>
    %23 = arith.mulf %17, %22 : vector<8x1xf32>
    %cst_16 = arith.constant dense<0.000000e+00> : vector<8xf32>
    %24 = vector.multi_reduction <add>, %20, %cst_16 [1] : vector<8x8xf32> to vector<8xf32>
    %25 = vector.shape_cast %24 : vector<8xf32> to vector<8x1xf32>
    %26 = arith.addf %23, %25 : vector<8x1xf32>
    %c0_17 = arith.constant 0 : index
    %c0_18 = arith.constant 0 : index
    %27 = vector.load %arg8[%c0_17, %c0_18] : memref<8x1xf32, #tpu.memory_space<vmem>>, vector<8x1xf32>
    tpu.vector_store %arg8[%c0_17, %c0_18], %26 {strides = array<i32>} : memref<8x1xf32, #tpu.memory_space<vmem>>, vector<8x1xf32>,
    %c0_19 = arith.constant 0 : index
    %c0_20 = arith.constant 0 : index
    %28 = vector.load %arg9[%c0_19, %c0_20] : memref<8x8xf32, #tpu.memory_space<vmem>>, vector<8x8xf32>
    %29 = vector.broadcast %17 : vector<8x1xf32> to vector<8x8xf32>
    %30 = arith.mulf %29, %28 : vector<8x8xf32>
    %31 = arith.addf %30, %21 : vector<8x8xf32>
    %c0_21 = arith.constant 0 : index
    %c0_22 = arith.constant 0 : index
    %32 = vector.load %arg9[%c0_21, %c0_22] : memref<8x8xf32, #tpu.memory_space<vmem>>, vector<8x8xf32>
    tpu.vector_store %arg9[%c0_21, %c0_22], %31 {strides = array<i32>} : memref<8x8xf32, #tpu.memory_space<vmem>>, vector<8x8xf32>,
    %c0_23 = arith.constant 0 : index
    %c0_24 = arith.constant 0 : index
    %33 = vector.load %arg7[%c0_23, %c0_24] : memref<8x1xf32, #tpu.memory_space<vmem>>, vector<8x1xf32>
    tpu.vector_store %arg7[%c0_23, %c0_24], %15 {strides = array<i32>} : memref<8x1xf32, #tpu.memory_space<vmem>>, vector<8x1xf32>,
    %c0_i32_25 = arith.constant 0 : i32
    %34 = arith.cmpi eq, %arg2, %c0_i32_25 : i32
    %35 = arith.extui %34 : i1 to i32
    %c0_i32_26 = arith.constant 0 : i32
    %36 = arith.cmpi ne, %35, %c0_i32_26 : i32
    scf.if %36 {
      %c0_27 = arith.constant 0 : index
      %c0_28 = arith.constant 0 : index
      %37 = vector.load %arg9[%c0_27, %c0_28] : memref<8x8xf32, #tpu.memory_space<vmem>>, vector<8x8xf32>
      %c0_29 = arith.constant 0 : index
      %c0_30 = arith.constant 0 : index
      %38 = vector.load %arg8[%c0_29, %c0_30] : memref<8x1xf32, #tpu.memory_space<vmem>>, vector<8x1xf32>
      %39 = tpu.reciprocal %38 {approx = true} : vector<8x1xf32> -> vector<8x1xf32>
      %40 = vector.broadcast %39 : vector<8x1xf32> to vector<8x8xf32>
      %41 = arith.mulf %37, %40 : vector<8x8xf32>
      %c0_31 = arith.constant 0 : index
      %c0_32 = arith.constant 0 : index
      %c0_33 = arith.constant 0 : index
      %42 = vector.load %arg6[%c0_31, %c0_32, %c0_33] : memref<1x8x8xf32, #tpu.memory_space<vmem>>, vector<1x8x8xf32>
      %43 = vector.shape_cast %42 : vector<1x8x8xf32> to vector<8x8xf32>
      %44 = vector.shape_cast %41 : vector<8x8xf32> to vector<1x8x8xf32>
      tpu.vector_store %arg6[%c0_31, %c0_32, %c0_33], %44 {strides = array<i32>} : memref<1x8x8xf32, #tpu.memory_space<vmem>>, vector<1x8x8xf32>,
    } else {
    }
    return
  }
  func.func @transform_0(%arg0: i32, %arg1: i32, %arg2: i32) -> (i32, i32, i32) {
    %c0_i32 = arith.constant 0 : i32
    %c0_i32_0 = arith.constant 0 : i32
    return %arg0, %arg1, %c0_i32 : i32, i32, i32
  }
  func.func @transform_1(%arg0: i32, %arg1: i32, %arg2: i32) -> (i32, i32, i32) {
    %c0_i32 = arith.constant 0 : i32
    %c0_i32_0 = arith.constant 0 : i32
    return %arg0, %arg2, %c0_i32 : i32, i32, i32
  }
  func.func @transform_2(%arg0: i32, %arg1: i32, %arg2: i32) -> (i32, i32, i32) {
    %c0_i32 = arith.constant 0 : i32
    %c0_i32_0 = arith.constant 0 : i32
    return %arg0, %arg2, %c0_i32 : i32, i32, i32
  }
  func.func @transform_3(%arg0: i32, %arg1: i32, %arg2: i32) -> (i32, i32, i32) {
    %c0_i32 = arith.constant 0 : i32
    %c0_i32_0 = arith.constant 0 : i32
    return %arg0, %arg1, %c0_i32 : i32, i32, i32
  }
}

module attributes {stable_mosaic.version = 11 : i64} {
  func.func @_linear_kernel(%arg0: i32, %arg1: i32, %arg2: i32, %arg3: memref<16x32xf32, #tpu.memory_space<vmem>>, %arg4: memref<32x32xf32, #tpu.memory_space<vmem>>, %arg5: memref<1x32xf32, #tpu.memory_space<vmem>>, %arg6: memref<16x32xf32, #tpu.memory_space<vmem>>, %arg7: memref<1x32xf32, #tpu.memory_space<vmem>>, %arg8: memref<1x32xf32, #tpu.memory_space<vmem>>, %arg9: memref<16x32xf32, #tpu.memory_space<vmem>>, %arg10: memref<16x32xf32, #tpu.memory_space<vmem>>, %arg11: memref<16x32xf32, #tpu.memory_space<vmem>>) attributes {dimension_semantics = [#tpu.dimension_semantics<parallel>, #tpu.dimension_semantics<parallel>, #tpu.dimension_semantics<arbitrary>], iteration_bounds = array<i64: 1, 1, 1>, scalar_prefetch = 0 : i64, scratch_operands = 1 : i64, tpu.core_type = #tpu.core_type<tc>, window_params = [{transform_indices = @transform_0, window_bounds = array<i64: 16, 32>}, {transform_indices = @transform_1, window_bounds = array<i64: 32, 32>}, {transform_indices = @transform_2, window_bounds = array<i64: 1, 32>}, {transform_indices = @transform_3, window_bounds = array<i64: 16, 32>}, {transform_indices = @transform_4, window_bounds = array<i64: 1, 32>}, {transform_indices = @transform_5, window_bounds = array<i64: 1, 32>}, {transform_indices = @transform_6, window_bounds = array<i64: 16, 32>}, {transform_indices = @transform_7, window_bounds = array<i64: 16, 32>}]} {
    %c0_i32 = arith.constant 0 : i32
    %0 = arith.cmpi eq, %arg2, %c0_i32 : i32
    %1 = arith.extui %0 : i1 to i32
    %c0_i32_0 = arith.constant 0 : i32
    %2 = arith.cmpi ne, %1, %c0_i32_0 : i32
    scf.if %2 {
      %cst_10 = arith.constant 0.000000e+00 : f32
      %12 = vector.broadcast %cst_10 : f32 to vector<16x32xf32>
      %c0_11 = arith.constant 0 : index
      %c0_12 = arith.constant 0 : index
      %13 = vector.load %arg11[%c0_11, %c0_12] : memref<16x32xf32, #tpu.memory_space<vmem>>, vector<16x32xf32>
      tpu.vector_store %arg11[%c0_11, %c0_12], %12 {strides = array<i32>} : memref<16x32xf32, #tpu.memory_space<vmem>>, vector<16x32xf32>,
    } else {
    }
    %c0 = arith.constant 0 : index
    %c0_1 = arith.constant 0 : index
    %3 = vector.load %arg3[%c0, %c0_1] : memref<16x32xf32, #tpu.memory_space<vmem>>, vector<16x32xf32>
    %c0_2 = arith.constant 0 : index
    %c0_3 = arith.constant 0 : index
    %4 = vector.load %arg4[%c0_2, %c0_3] : memref<32x32xf32, #tpu.memory_space<vmem>>, vector<32x32xf32>
    %c0_4 = arith.constant 0 : index
    %c0_5 = arith.constant 0 : index
    %5 = vector.load %arg11[%c0_4, %c0_5] : memref<16x32xf32, #tpu.memory_space<vmem>>, vector<16x32xf32>
    %cst = arith.constant dense<0.000000e+00> : vector<16x32xf32>
    %6 = tpu.matmul %3, %4, %cst {dimension_numbers = #tpu.dot_dimension_numbers<[1], [0], [0], [1], [0, 0, 1, 1], [], []>} : vector<16x32xf32>, vector<32x32xf32>, vector<16x32xf32> -> vector<16x32xf32>
    %7 = arith.addf %5, %6 : vector<16x32xf32>
    %c0_6 = arith.constant 0 : index
    %c0_7 = arith.constant 0 : index
    %8 = vector.load %arg11[%c0_6, %c0_7] : memref<16x32xf32, #tpu.memory_space<vmem>>, vector<16x32xf32>
    tpu.vector_store %arg11[%c0_6, %c0_7], %7 {strides = array<i32>} : memref<16x32xf32, #tpu.memory_space<vmem>>, vector<16x32xf32>,
    %c0_i32_8 = arith.constant 0 : i32
    %9 = arith.cmpi eq, %arg2, %c0_i32_8 : i32
    %10 = arith.extui %9 : i1 to i32
    %c0_i32_9 = arith.constant 0 : i32
    %11 = arith.cmpi ne, %10, %c0_i32_9 : i32
    scf.if %11 {
      %c0_10 = arith.constant 0 : index
      %c0_11 = arith.constant 0 : index
      %12 = vector.load %arg11[%c0_10, %c0_11] : memref<16x32xf32, #tpu.memory_space<vmem>>, vector<16x32xf32>
      %c0_12 = arith.constant 0 : index
      %c0_13 = arith.constant 0 : index
      %13 = vector.load %arg5[%c0_12, %c0_13] : memref<1x32xf32, #tpu.memory_space<vmem>>, vector<1x32xf32>
      %14 = vector.broadcast %13 : vector<1x32xf32> to vector<16x32xf32>
      %15 = arith.addf %12, %14 : vector<16x32xf32>
      %c0_14 = arith.constant 0 : index
      %c0_15 = arith.constant 0 : index
      %16 = vector.load %arg6[%c0_14, %c0_15] : memref<16x32xf32, #tpu.memory_space<vmem>>, vector<16x32xf32>
      %17 = arith.addf %15, %16 : vector<16x32xf32>
      %c0_16 = arith.constant 0 : index
      %c0_17 = arith.constant 0 : index
      %18 = vector.load %arg9[%c0_16, %c0_17] : memref<16x32xf32, #tpu.memory_space<vmem>>, vector<16x32xf32>
      tpu.vector_store %arg9[%c0_16, %c0_17], %17 {strides = array<i32>} : memref<16x32xf32, #tpu.memory_space<vmem>>, vector<16x32xf32>,
      %cst_18 = arith.constant dense<0.000000e+00> : vector<16xf32>
      %19 = vector.multi_reduction <add>, %17, %cst_18 [1] : vector<16x32xf32> to vector<16xf32>
      %20 = vector.shape_cast %19 : vector<16xf32> to vector<16x1xf32>
      %cst_19 = arith.constant 3.200000e+01 : f32
      %21 = vector.broadcast %cst_19 : f32 to vector<16x1xf32>
      %22 = arith.divf %20, %21 : vector<16x1xf32>
      %23 = vector.broadcast %22 : vector<16x1xf32> to vector<16x32xf32>
      %24 = arith.subf %17, %23 : vector<16x32xf32>
      %25 = arith.mulf %24, %24 : vector<16x32xf32>
      %cst_20 = arith.constant dense<0.000000e+00> : vector<16xf32>
      %26 = vector.multi_reduction <add>, %25, %cst_20 [1] : vector<16x32xf32> to vector<16xf32>
      %27 = vector.shape_cast %26 : vector<16xf32> to vector<16x1xf32>
      %cst_21 = arith.constant 3.100000e+01 : f32
      %28 = vector.broadcast %cst_21 : f32 to vector<16x1xf32>
      %29 = arith.divf %27, %28 : vector<16x1xf32>
      %30 = math.sqrt %29 : vector<16x1xf32>
      %cst_22 = arith.constant 9.99999997E-7 : f32
      %31 = vector.broadcast %cst_22 : f32 to vector<16x1xf32>
      %32 = arith.addf %30, %31 : vector<16x1xf32>
      %33 = tpu.reciprocal %32 {approx = true} : vector<16x1xf32> -> vector<16x1xf32>
      %c0_23 = arith.constant 0 : index
      %c0_24 = arith.constant 0 : index
      %34 = vector.load %arg7[%c0_23, %c0_24] : memref<1x32xf32, #tpu.memory_space<vmem>>, vector<1x32xf32>
      %c0_25 = arith.constant 0 : index
      %c0_26 = arith.constant 0 : index
      %35 = vector.load %arg8[%c0_25, %c0_26] : memref<1x32xf32, #tpu.memory_space<vmem>>, vector<1x32xf32>
      %36 = vector.broadcast %34 : vector<1x32xf32> to vector<16x32xf32>
      %37 = vector.broadcast %33 : vector<16x1xf32> to vector<16x32xf32>
      %38 = arith.mulf %36, %37 : vector<16x32xf32>
      %39 = arith.mulf %24, %38 : vector<16x32xf32>
      %40 = vector.broadcast %35 : vector<1x32xf32> to vector<16x32xf32>
      %41 = arith.addf %39, %40 : vector<16x32xf32>
      %c0_27 = arith.constant 0 : index
      %c0_28 = arith.constant 0 : index
      %42 = vector.load %arg10[%c0_27, %c0_28] : memref<16x32xf32, #tpu.memory_space<vmem>>, vector<16x32xf32>
      tpu.vector_store %arg10[%c0_27, %c0_28], %41 {strides = array<i32>} : memref<16x32xf32, #tpu.memory_space<vmem>>, vector<16x32xf32>,
    } else {
    }
    return
  }
  func.func @transform_0(%arg0: i32, %arg1: i32, %arg2: i32) -> (i32, i32) {
    %c0_i32 = arith.constant 0 : i32
    return %arg0, %arg2 : i32, i32
  }
  func.func @transform_1(%arg0: i32, %arg1: i32, %arg2: i32) -> (i32, i32) {
    %c0_i32 = arith.constant 0 : i32
    return %arg2, %arg1 : i32, i32
  }
  func.func @transform_2(%arg0: i32, %arg1: i32, %arg2: i32) -> (i32, i32) {
    %c0_i32 = arith.constant 0 : i32
    %c0_i32_0 = arith.constant 0 : i32
    return %c0_i32, %arg1 : i32, i32
  }
  func.func @transform_3(%arg0: i32, %arg1: i32, %arg2: i32) -> (i32, i32) {
    %c0_i32 = arith.constant 0 : i32
    return %arg0, %arg1 : i32, i32
  }
  func.func @transform_4(%arg0: i32, %arg1: i32, %arg2: i32) -> (i32, i32) {
    %c0_i32 = arith.constant 0 : i32
    %c0_i32_0 = arith.constant 0 : i32
    return %c0_i32, %arg1 : i32, i32
  }
  func.func @transform_5(%arg0: i32, %arg1: i32, %arg2: i32) -> (i32, i32) {
    %c0_i32 = arith.constant 0 : i32
    %c0_i32_0 = arith.constant 0 : i32
    return %c0_i32, %arg1 : i32, i32
  }
  func.func @transform_6(%arg0: i32, %arg1: i32, %arg2: i32) -> (i32, i32) {
    %c0_i32 = arith.constant 0 : i32
    return %arg0, %arg1 : i32, i32
  }
  func.func @transform_7(%arg0: i32, %arg1: i32, %arg2: i32) -> (i32, i32) {
    %c0_i32 = arith.constant 0 : i32
    return %arg0, %arg1 : i32, i32
  }
}

module attributes {stable_mosaic.version = 11 : i64} {
  func.func @_linear_kernel(%arg0: i32, %arg1: i32, %arg2: i32, %arg3: memref<16x32xf32, #tpu.memory_space<vmem>>, %arg4: memref<32x64xf32, #tpu.memory_space<vmem>>, %arg5: memref<1x64xf32, #tpu.memory_space<vmem>>, %arg6: memref<16x64xf32, #tpu.memory_space<vmem>>, %arg7: memref<16x64xf32, #tpu.memory_space<vmem>>) attributes {dimension_semantics = [#tpu.dimension_semantics<parallel>, #tpu.dimension_semantics<parallel>, #tpu.dimension_semantics<arbitrary>], iteration_bounds = array<i64: 1, 1, 1>, scalar_prefetch = 0 : i64, scratch_operands = 1 : i64, tpu.core_type = #tpu.core_type<tc>, window_params = [{transform_indices = @transform_0, window_bounds = array<i64: 16, 32>}, {transform_indices = @transform_1, window_bounds = array<i64: 32, 64>}, {transform_indices = @transform_2, window_bounds = array<i64: 1, 64>}, {transform_indices = @transform_3, window_bounds = array<i64: 16, 64>}]} {
    %c0_i32 = arith.constant 0 : i32
    %0 = arith.cmpi eq, %arg2, %c0_i32 : i32
    %1 = arith.extui %0 : i1 to i32
    %c0_i32_0 = arith.constant 0 : i32
    %2 = arith.cmpi ne, %1, %c0_i32_0 : i32
    scf.if %2 {
      %cst_10 = arith.constant 0.000000e+00 : f32
      %12 = vector.broadcast %cst_10 : f32 to vector<16x64xf32>
      %c0_11 = arith.constant 0 : index
      %c0_12 = arith.constant 0 : index
      %13 = vector.load %arg7[%c0_11, %c0_12] : memref<16x64xf32, #tpu.memory_space<vmem>>, vector<16x64xf32>
      tpu.vector_store %arg7[%c0_11, %c0_12], %12 {strides = array<i32>} : memref<16x64xf32, #tpu.memory_space<vmem>>, vector<16x64xf32>,
    } else {
    }
    %c0 = arith.constant 0 : index
    %c0_1 = arith.constant 0 : index
    %3 = vector.load %arg3[%c0, %c0_1] : memref<16x32xf32, #tpu.memory_space<vmem>>, vector<16x32xf32>
    %c0_2 = arith.constant 0 : index
    %c0_3 = arith.constant 0 : index
    %4 = vector.load %arg4[%c0_2, %c0_3] : memref<32x64xf32, #tpu.memory_space<vmem>>, vector<32x64xf32>
    %c0_4 = arith.constant 0 : index
    %c0_5 = arith.constant 0 : index
    %5 = vector.load %arg7[%c0_4, %c0_5] : memref<16x64xf32, #tpu.memory_space<vmem>>, vector<16x64xf32>
    %cst = arith.constant dense<0.000000e+00> : vector<16x64xf32>
    %6 = tpu.matmul %3, %4, %cst {dimension_numbers = #tpu.dot_dimension_numbers<[1], [0], [0], [1], [0, 0, 1, 1], [], []>} : vector<16x32xf32>, vector<32x64xf32>, vector<16x64xf32> -> vector<16x64xf32>
    %7 = arith.addf %5, %6 : vector<16x64xf32>
    %c0_6 = arith.constant 0 : index
    %c0_7 = arith.constant 0 : index
    %8 = vector.load %arg7[%c0_6, %c0_7] : memref<16x64xf32, #tpu.memory_space<vmem>>, vector<16x64xf32>
    tpu.vector_store %arg7[%c0_6, %c0_7], %7 {strides = array<i32>} : memref<16x64xf32, #tpu.memory_space<vmem>>, vector<16x64xf32>,
    %c0_i32_8 = arith.constant 0 : i32
    %9 = arith.cmpi eq, %arg2, %c0_i32_8 : i32
    %10 = arith.extui %9 : i1 to i32
    %c0_i32_9 = arith.constant 0 : i32
    %11 = arith.cmpi ne, %10, %c0_i32_9 : i32
    scf.if %11 {
      %c0_10 = arith.constant 0 : index
      %c0_11 = arith.constant 0 : index
      %12 = vector.load %arg7[%c0_10, %c0_11] : memref<16x64xf32, #tpu.memory_space<vmem>>, vector<16x64xf32>
      %c0_12 = arith.constant 0 : index
      %c0_13 = arith.constant 0 : index
      %13 = vector.load %arg5[%c0_12, %c0_13] : memref<1x64xf32, #tpu.memory_space<vmem>>, vector<1x64xf32>
      %14 = vector.broadcast %13 : vector<1x64xf32> to vector<16x64xf32>
      %15 = arith.addf %12, %14 : vector<16x64xf32>
      %cst_14 = arith.constant 0.000000e+00 : f32
      %16 = vector.broadcast %cst_14 : f32 to vector<16x64xf32>
      %17 = arith.maximumf %15, %16 : vector<16x64xf32>
      %c0_15 = arith.constant 0 : index
      %c0_16 = arith.constant 0 : index
      %18 = vector.load %arg6[%c0_15, %c0_16] : memref<16x64xf32, #tpu.memory_space<vmem>>, vector<16x64xf32>
      tpu.vector_store %arg6[%c0_15, %c0_16], %17 {strides = array<i32>} : memref<16x64xf32, #tpu.memory_space<vmem>>, vector<16x64xf32>,
    } else {
    }
    return
  }
  func.func @transform_0(%arg0: i32, %arg1: i32, %arg2: i32) -> (i32, i32) {
    %c0_i32 = arith.constant 0 : i32
    return %arg0, %arg2 : i32, i32
  }
  func.func @transform_1(%arg0: i32, %arg1: i32, %arg2: i32) -> (i32, i32) {
    %c0_i32 = arith.constant 0 : i32
    return %arg2, %arg1 : i32, i32
  }
  func.func @transform_2(%arg0: i32, %arg1: i32, %arg2: i32) -> (i32, i32) {
    %c0_i32 = arith.constant 0 : i32
    %c0_i32_0 = arith.constant 0 : i32
    return %c0_i32, %arg1 : i32, i32
  }
  func.func @transform_3(%arg0: i32, %arg1: i32, %arg2: i32) -> (i32, i32) {
    %c0_i32 = arith.constant 0 : i32
    return %arg0, %arg1 : i32, i32
  }
}

module attributes {stable_mosaic.version = 11 : i64} {
  func.func @_linear_kernel(%arg0: i32, %arg1: i32, %arg2: i32, %arg3: memref<16x64xf32, #tpu.memory_space<vmem>>, %arg4: memref<64x32xf32, #tpu.memory_space<vmem>>, %arg5: memref<1x32xf32, #tpu.memory_space<vmem>>, %arg6: memref<16x32xf32, #tpu.memory_space<vmem>>, %arg7: memref<16x32xf32, #tpu.memory_space<vmem>>, %arg8: memref<16x32xf32, #tpu.memory_space<vmem>>) attributes {dimension_semantics = [#tpu.dimension_semantics<parallel>, #tpu.dimension_semantics<parallel>, #tpu.dimension_semantics<arbitrary>], iteration_bounds = array<i64: 1, 1, 1>, scalar_prefetch = 0 : i64, scratch_operands = 1 : i64, tpu.core_type = #tpu.core_type<tc>, window_params = [{transform_indices = @transform_0, window_bounds = array<i64: 16, 64>}, {transform_indices = @transform_1, window_bounds = array<i64: 64, 32>}, {transform_indices = @transform_2, window_bounds = array<i64: 1, 32>}, {transform_indices = @transform_3, window_bounds = array<i64: 16, 32>}, {transform_indices = @transform_4, window_bounds = array<i64: 16, 32>}]} {
    %c0_i32 = arith.constant 0 : i32
    %0 = arith.cmpi eq, %arg2, %c0_i32 : i32
    %1 = arith.extui %0 : i1 to i32
    %c0_i32_0 = arith.constant 0 : i32
    %2 = arith.cmpi ne, %1, %c0_i32_0 : i32
    scf.if %2 {
      %cst_10 = arith.constant 0.000000e+00 : f32
      %12 = vector.broadcast %cst_10 : f32 to vector<16x32xf32>
      %c0_11 = arith.constant 0 : index
      %c0_12 = arith.constant 0 : index
      %13 = vector.load %arg8[%c0_11, %c0_12] : memref<16x32xf32, #tpu.memory_space<vmem>>, vector<16x32xf32>
      tpu.vector_store %arg8[%c0_11, %c0_12], %12 {strides = array<i32>} : memref<16x32xf32, #tpu.memory_space<vmem>>, vector<16x32xf32>,
    } else {
    }
    %c0 = arith.constant 0 : index
    %c0_1 = arith.constant 0 : index
    %3 = vector.load %arg3[%c0, %c0_1] : memref<16x64xf32, #tpu.memory_space<vmem>>, vector<16x64xf32>
    %c0_2 = arith.constant 0 : index
    %c0_3 = arith.constant 0 : index
    %4 = vector.load %arg4[%c0_2, %c0_3] : memref<64x32xf32, #tpu.memory_space<vmem>>, vector<64x32xf32>
    %c0_4 = arith.constant 0 : index
    %c0_5 = arith.constant 0 : index
    %5 = vector.load %arg8[%c0_4, %c0_5] : memref<16x32xf32, #tpu.memory_space<vmem>>, vector<16x32xf32>
    %cst = arith.constant dense<0.000000e+00> : vector<16x32xf32>
    %6 = tpu.matmul %3, %4, %cst {dimension_numbers = #tpu.dot_dimension_numbers<[1], [0], [0], [1], [0, 0, 1, 1], [], []>} : vector<16x64xf32>, vector<64x32xf32>, vector<16x32xf32> -> vector<16x32xf32>
    %7 = arith.addf %5, %6 : vector<16x32xf32>
    %c0_6 = arith.constant 0 : index
    %c0_7 = arith.constant 0 : index
    %8 = vector.load %arg8[%c0_6, %c0_7] : memref<16x32xf32, #tpu.memory_space<vmem>>, vector<16x32xf32>
    tpu.vector_store %arg8[%c0_6, %c0_7], %7 {strides = array<i32>} : memref<16x32xf32, #tpu.memory_space<vmem>>, vector<16x32xf32>,
    %c0_i32_8 = arith.constant 0 : i32
    %9 = arith.cmpi eq, %arg2, %c0_i32_8 : i32
    %10 = arith.extui %9 : i1 to i32
    %c0_i32_9 = arith.constant 0 : i32
    %11 = arith.cmpi ne, %10, %c0_i32_9 : i32
    scf.if %11 {
      %c0_10 = arith.constant 0 : index
      %c0_11 = arith.constant 0 : index
      %12 = vector.load %arg8[%c0_10, %c0_11] : memref<16x32xf32, #tpu.memory_space<vmem>>, vector<16x32xf32>
      %c0_12 = arith.constant 0 : index
      %c0_13 = arith.constant 0 : index
      %13 = vector.load %arg5[%c0_12, %c0_13] : memref<1x32xf32, #tpu.memory_space<vmem>>, vector<1x32xf32>
      %14 = vector.broadcast %13 : vector<1x32xf32> to vector<16x32xf32>
      %15 = arith.addf %12, %14 : vector<16x32xf32>
      %c0_14 = arith.constant 0 : index
      %c0_15 = arith.constant 0 : index
      %16 = vector.load %arg6[%c0_14, %c0_15] : memref<16x32xf32, #tpu.memory_space<vmem>>, vector<16x32xf32>
      %17 = arith.addf %15, %16 : vector<16x32xf32>
      %c0_16 = arith.constant 0 : index
      %c0_17 = arith.constant 0 : index
      %18 = vector.load %arg7[%c0_16, %c0_17] : memref<16x32xf32, #tpu.memory_space<vmem>>, vector<16x32xf32>
      tpu.vector_store %arg7[%c0_16, %c0_17], %17 {strides = array<i32>} : memref<16x32xf32, #tpu.memory_space<vmem>>, vector<16x32xf32>,
    } else {
    }
    return
  }
  func.func @transform_0(%arg0: i32, %arg1: i32, %arg2: i32) -> (i32, i32) {
    %c0_i32 = arith.constant 0 : i32
    return %arg0, %arg2 : i32, i32
  }
  func.func @transform_1(%arg0: i32, %arg1: i32, %arg2: i32) -> (i32, i32) {
    %c0_i32 = arith.constant 0 : i32
    return %arg2, %arg1 : i32, i32
  }
  func.func @transform_2(%arg0: i32, %arg1: i32, %arg2: i32) -> (i32, i32) {
    %c0_i32 = arith.constant 0 : i32
    %c0_i32_0 = arith.constant 0 : i32
    return %c0_i32, %arg1 : i32, i32
  }
  func.func @transform_3(%arg0: i32, %arg1: i32, %arg2: i32) -> (i32, i32) {
    %c0_i32 = arith.constant 0 : i32
    return %arg0, %arg1 : i32, i32
  }
  func.func @transform_4(%arg0: i32, %arg1: i32, %arg2: i32) -> (i32, i32) {
    %c0_i32 = arith.constant 0 : i32
    return %arg0, %arg1 : i32, i32
  }
}

</mosaic_0001>

<llo_original>
// kernel: encoder_layer_forward.6
$region0: #{encoder_layer_forward.6}
  #allocation0 [shape = 'u32[]', space=smem, size = 0x4, offset = 0x4, fixed_abs, tag = 'smem constant byte address 0x4 - core index']
  #allocation1 [shape = 'u32[144,128]{1,0:T(1,128)}', space=vmem, size = 0x12000, scoped, tag = 'internal scratch']
  %s0 = inlined_call_operand.vmem [shape: f32[16,32], index: 0, kind: input, shape index: {}]
  %s1 = inlined_call_operand.vmem [shape: f32[1,32], index: 1, kind: input, shape index: {}]
  %s2 = inlined_call_operand.vmem [shape: f32[1,32], index: 2, kind: input, shape index: {}]
  %s3 = inlined_call_operand.vmem [shape: f32[16,32], index: 3, kind: output, shape index: {}]
  %s4 = sld [smem:[#allocation0]]
  $region22: #{encoder_layer_forward.6} parent=0
    _
  %s6 = ssub.s32 1, %s4
  %s7 = scalar_select 0, %s6, %s4
  // Predicated region
  $region2: #{encoder_layer_forward.6} parent=0 // pred_check
    _
  $region3: #{encoder_layer_forward.6} parent=0 // pred_check_branch
    %9 = sbr.rel (0) target = $region5
  $region4: #{encoder_layer_forward.6} parent=0 // pred_region
    _
  $region5: #{encoder_layer_forward.6} parent=0 // pred_fallthru
    _
  // Predicated region
  $region6: #{encoder_layer_forward.6} parent=0 // pred_check
    _
  $region7: #{encoder_layer_forward.6} parent=0 // pred_check_branch
    %11 = sbr.rel (0) target = $region9
  $region8: #{encoder_layer_forward.6} parent=0 // pred_region
    _
  $region9: #{encoder_layer_forward.6} parent=0 // pred_fallthru
    _
  // Predicated region
  $region10: #{encoder_layer_forward.6} parent=0 // pred_check
    _
  $region11: #{encoder_layer_forward.6} parent=0 // pred_check_branch
    %13 = sbr.rel (0) target = $region13
  $region12: #{encoder_layer_forward.6} parent=0 // pred_region
    _
  $region13: #{encoder_layer_forward.6} parent=0 // pred_fallthru
    _
  %v14 = vld [vmem:[%s0] sm:$0xff]
  %v15 = vld [vmem:[%s0 + $0x8] sm:$0xff]
  %vm16 = vcmask 261120
  %v17 = vsel %vm16, %v14, 0.0
  %18 = vadd.xlane.f32.xlu0 %v17
  %v19 = vpop.xlane.xlu0 %18
  %v20 = vsel %vm16, %v15, 0.0
  %21 = vadd.xlane.f32.xlu0 %v20
  %v22 = vpop.xlane.xlu0 %21
  %v23 = vrcp.pop 32.0
  %v24 = vmul.f32 %v19, %v23
  %v25 = vmul.f32 %v22, %v23
  %v26 = vsub.f32 %v14, %v24
  %v27 = vsub.f32 %v15, %v25
  %v28 = vmul.f32 %v26, %v26
  %v29 = vmul.f32 %v27, %v27
  %v30 = vsel %vm16, %v28, 0.0
  %31 = vadd.xlane.f32.xlu0 %v30
  %v32 = vpop.xlane.xlu0 %31
  %v33 = vsel %vm16, %v29, 0.0
  %34 = vadd.xlane.f32.xlu0 %v33
  %v35 = vpop.xlane.xlu0 %34
  %v36 = vrcp.pop 31.0
  %v37 = vmul.f32 %v32, %v36
  %v38 = vmul.f32 %v35, %v36
  %v39 = vrsqrt.pop %v37
  %v40 = vmul.f32 %v37, %v39
  %vm41 = vcmp.eq.f32.partialorder %v37, inf
  %v42 = vsel %vm41, %v37, %v40
  %vm43 = vcmp.eq.f32.partialorder %v37, 0.0
  %v44 = vand.u32 %v37, 2147483648
  %v45 = vsel %vm43, %v44, %v42
  %v46 = vrsqrt.pop %v38
  %v47 = vmul.f32 %v38, %v46
  %vm48 = vcmp.eq.f32.partialorder %v38, inf
  %v49 = vsel %vm48, %v38, %v47
  %vm50 = vcmp.eq.f32.partialorder %v38, 0.0
  %v51 = vand.u32 %v38, 2147483648
  %v52 = vsel %vm50, %v51, %v49
  %v53 = vadd.f32 %v45, 1e-06
  %v54 = vadd.f32 %v52, 1e-06
  %v55 = vrcp.pop %v53
  %v56 = vrcp.pop %v54
  %v57 = vld [vmem:[%s1] sm:$0x1]
  %v58 = vld [vmem:[%s2] sm:$0x1]
  %v60 = vlaneseq
  %v61 = vshrl.u32 %v60, 7
  %v62 = vsub.s32 0, %v61
  %v63 = vrot.slane %v57, %v62
  %v65 = vmul.f32 %v63, %v55
  %v66 = vmul.f32 %v63, %v56
  %v67 = vmul.f32 %v26, %v65
  %v68 = vmul.f32 %v27, %v66
  %v70 = vlaneseq
  %v71 = vshrl.u32 %v70, 7
  %v72 = vsub.s32 0, %v71
  %v73 = vrot.slane %v58, %v72
  %v75 = vadd.f32 %v67, %v73
  %v76 = vadd.f32 %v68, %v73
  %77 = vst.msk [vmem:[%s3] sm:$0xff] %vm16, %v75
  %78 = vst.msk [vmem:[%s3 + $0x8] sm:$0xff] %vm16, %v76
  // Predicated region
  $region14: #{encoder_layer_forward.6} parent=0 // pred_check
    _
  $region15: #{encoder_layer_forward.6} parent=0 // pred_check_branch
    %80 = sbr.rel (0) target = $region17
  $region16: #{encoder_layer_forward.6} parent=0 // pred_region
    _
  $region17: #{encoder_layer_forward.6} parent=0 // pred_fallthru
    _
  // Predicated region
  $region18: #{encoder_layer_forward.6} parent=0 // pred_check
    _
  $region19: #{encoder_layer_forward.6} parent=0 // pred_check_branch
    %82 = sbr.rel (0) target = $region21
  $region20: #{encoder_layer_forward.6} parent=0 // pred_region
    _
  $region21: #{encoder_layer_forward.6} parent=0 // pred_fallthru
    _

// kernel: encoder_layer_forward.7
$region0: #{encoder_layer_forward.7}
  #allocation0 [shape = 'u32[]', space=smem, size = 0x4, offset = 0x4, fixed_abs, tag = 'smem constant byte address 0x4 - core index']
  #allocation1 [shape = 'u32[144,128]{1,0:T(1,128)}', space=vmem, size = 0x12000, scoped, tag = 'internal scratch']
  #allocation2 [shape = 'f32[16,96]{1,0:T(8,128)}', space=vmem, size = 0x2000, scoped, tag = 'scratch operand']
  %s0 = inlined_call_operand.vmem [shape: f32[16,32], index: 0, kind: input, shape index: {}]
  %s1 = inlined_call_operand.vmem [shape: f32[32,96], index: 1, kind: input, shape index: {}]
  %s2 = inlined_call_operand.vmem [shape: f32[1,96], index: 2, kind: input, shape index: {}]
  %s3 = inlined_call_operand.vmem [shape: f32[16,96], index: 3, kind: output, shape index: {}]
  %s4 = sld [smem:[#allocation0]]
  $region30: #{encoder_layer_forward.7} parent=0
    _
  %s6 = ssub.s32 1, %s4
  %s7 = scalar_select 0, %s6, %s4
  // Predicated region
  $region2: #{encoder_layer_forward.7} parent=0 // pred_check
    _
  $region3: #{encoder_layer_forward.7} parent=0 // pred_check_branch
    %9 = sbr.rel (0) target = $region5
  $region4: #{encoder_layer_forward.7} parent=0 // pred_region
    _
  $region5: #{encoder_layer_forward.7} parent=0 // pred_fallthru
    _
  // Predicated region
  $region6: #{encoder_layer_forward.7} parent=0 // pred_check
    _
  $region7: #{encoder_layer_forward.7} parent=0 // pred_check_branch
    %11 = sbr.rel (0) target = $region9
  $region8: #{encoder_layer_forward.7} parent=0 // pred_region
    _
  $region9: #{encoder_layer_forward.7} parent=0 // pred_fallthru
    _
  // Predicated region
  $region10: #{encoder_layer_forward.7} parent=0 // pred_check
    _
  $region11: #{encoder_layer_forward.7} parent=0 // pred_check_branch
    %13 = sbr.rel (0) target = $region13
  $region12: #{encoder_layer_forward.7} parent=0 // pred_region
    _
  $region13: #{encoder_layer_forward.7} parent=0 // pred_fallthru
    _
  %p14 = scmp.eq.s32.totalorder 0, 0
  // Predicated region
  $region14: #{encoder_layer_forward.7} parent=0 // pred_check
    %p15 = pneg %p14
  $region15: #{encoder_layer_forward.7} parent=0 // pred_check_branch
    %17 = sbr.rel (%p15) target = $region17
  $region16: #{encoder_layer_forward.7} parent=0 // pred_region
    %vm18 = vcmask 785408
    %19 = vst.msk [vmem:[#allocation2] sm:$0xff] %vm18, 0.0
    %20 = vst.msk [vmem:[#allocation2 + $0x8] sm:$0xff] %vm18, 0.0
  $region17: #{encoder_layer_forward.7} parent=0 // pred_fallthru
    _
  %v21 = vld [vmem:[%s0] sm:$0xff]
  %v22 = vld [vmem:[%s0 + $0x8] sm:$0xff]
  %v23 = vld [vmem:[%s1] sm:$0xff]
  %v24 = vld [vmem:[%s1 + $0x8] sm:$0xff]
  %v25 = vld [vmem:[%s1 + $0x10] sm:$0xff]
  %v26 = vld [vmem:[%s1 + $0x18] sm:$0xff]
  %v27 = vld [vmem:[#allocation2] sm:$0xff]
  %v28 = vld [vmem:[#allocation2 + $0x8] sm:$0xff]
  %vm29 = vcmask 261120
  %v31 = vsel %vm29, %v21, 0
  %v34 = vsel %vm29, %v22, 0
  %36 = vmatprep.subr.mxu0 0.0
  %37 = vmatpush1.msra.mxu0 0.0
  %38 = vmatprep.subr.mxu0 0.0
  %39 = vmatpush1.msra.mxu0 0.0
  %40 = vmatprep.subr.mxu0 0.0
  %41 = vmatpush1.msra.mxu0 0.0
  %42 = vmatprep.subr.mxu0 0.0
  %43 = vmatpush1.msra.mxu0 0.0
  %44 = vmatprep.subr.mxu0 0.0
  %45 = vmatpush1.msra.mxu0 0.0
  %46 = vmatprep.subr.mxu0 0.0
  %47 = vmatpush1.msra.mxu0 0.0
  %48 = vmatprep.subr.mxu0 0.0
  %49 = vmatpush1.msra.mxu0 0.0
  %50 = vmatprep.subr.mxu0 0.0
  %51 = vmatpush1.msra.mxu0 0.0
  %52 = vmatprep.subr.mxu0 0.0
  %53 = vmatpush1.msra.mxu0 0.0
  %54 = vmatprep.subr.mxu0 0.0
  %55 = vmatpush1.msra.mxu0 0.0
  %56 = vmatprep.subr.mxu0 0.0
  %57 = vmatpush1.msra.mxu0 0.0
  %58 = vmatprep.subr.mxu0 0.0
  %59 = vmatpush1.msra.mxu0 0.0
  %60 = vmatprep.subr.mxu0 0.0
  %61 = vmatpush1.msra.mxu0 %v26
  %62 = vmatprep.subr.mxu0 0.0
  %63 = vmatpush1.msra.mxu0 %v25
  %64 = vmatprep.subr.mxu0 0.0
  %65 = vmatpush1.msra.mxu0 %v24
  %66 = vmatprep.subr.mxu0 0.0
  %67 = vmatpush1.msra.mxu0 %v23
  %68 = vmatprep.subr.mxu0 0.0
  %69 = vmatpush2.msra.mxu0 0.0
  %70 = vmatprep.subr.mxu0 0.0
  %71 = vmatpush2.msra.mxu0 0.0
  %72 = vmatprep.subr.mxu0 0.0
  %73 = vmatpush2.msra.mxu0 0.0
  %74 = vmatprep.subr.mxu0 0.0
  %75 = vmatpush2.msra.mxu0 0.0
  %76 = vmatprep.subr.mxu0 0.0
  %77 = vmatpush2.msra.mxu0 0.0
  %78 = vmatprep.subr.mxu0 0.0
  %79 = vmatpush2.msra.mxu0 0.0
  %80 = vmatprep.subr.mxu0 0.0
  %81 = vmatpush2.msra.mxu0 0.0
  %82 = vmatprep.subr.mxu0 0.0
  %83 = vmatpush2.msra.mxu0 0.0
  %84 = vmatprep.subr.mxu0 0.0
  %85 = vmatpush2.msra.mxu0 0.0
  %86 = vmatprep.subr.mxu0 0.0
  %87 = vmatpush2.msra.mxu0 0.0
  %88 = vmatprep.subr.mxu0 0.0
  %89 = vmatpush2.msra.mxu0 0.0
  %90 = vmatprep.subr.mxu0 0.0
  %91 = vmatpush2.msra.mxu0 0.0
  %92 = vmatprep.subr.mxu0 0.0
  %93 = vmatpush2.msra.mxu0 0.0
  %94 = vmatprep.subr.mxu0 0.0
  %95 = vmatpush2.msra.mxu0 0.0
  %96 = vmatprep.subr.mxu0 0.0
  %97 = vmatpush2.msra.mxu0 0.0
  %98 = vmatprep.subr.mxu0 0.0
  %99 = vmatpush2.msra.mxu0 0.0
  %100 = vmatprep.mubr.f32.mxu0 0.0
  %101 = vmatmul.mubr.f32.gmra.mxu0 %v31
  %v102 = vpop.f32.mrf.mxu0
  %v103 = vadd.f32 0.0, %v102
  %v104 = vpop.f32.mrf.mxu0
  %105 = vmatprep.mubr.f32.mxu0 0.0
  %106 = vmatmul.mubr.f32.gmra.mxu0 %v34
  %v107 = vpop.f32.mrf.mxu0
  %v108 = vadd.f32 0.0, %v107
  %v109 = vpop.f32.mrf.mxu0
  %110 = vdwg.mxu0
  %v111 = vadd.f32 %v27, %v103
  %v112 = vadd.f32 %v28, %v108
  %vm113 = vcmask 785408
  %114 = vst.msk [vmem:[#allocation2] sm:$0xff] %vm113, %v111
  %115 = vst.msk [vmem:[#allocation2 + $0x8] sm:$0xff] %vm113, %v112
  // Predicated region
  $region18: #{encoder_layer_forward.7} parent=0 // pred_check
    %p116 = pneg %p14
  $region19: #{encoder_layer_forward.7} parent=0 // pred_check_branch
    %118 = sbr.rel (%p116) target = $region21
  $region20: #{encoder_layer_forward.7} parent=0 // pred_region
    %v119 = vld [vmem:[#allocation2] sm:$0xff]
    %v120 = vld [vmem:[#allocation2 + $0x8] sm:$0xff]
    %v121 = vld [vmem:[%s2] sm:$0x1]
    %v123 = vlaneseq
    %v124 = vshrl.u32 %v123, 7
    %v125 = vsub.s32 0, %v124
    %v126 = vrot.slane %v121, %v125
    %v128 = vadd.f32 %v119, %v126
    %v129 = vadd.f32 %v120, %v126
    %130 = vst.msk [vmem:[%s3] sm:$0xff] %vm113, %v128
    %131 = vst.msk [vmem:[%s3 + $0x8] sm:$0xff] %vm113, %v129
  $region21: #{encoder_layer_forward.7} parent=0 // pred_fallthru
    _
  // Predicated region
  $region22: #{encoder_layer_forward.7} parent=0 // pred_check
    _
  $region23: #{encoder_layer_forward.7} parent=0 // pred_check_branch
    %133 = sbr.rel (0) target = $region25
  $region24: #{encoder_layer_forward.7} parent=0 // pred_region
    _
  $region25: #{encoder_layer_forward.7} parent=0 // pred_fallthru
    _
  // Predicated region
  $region26: #{encoder_layer_forward.7} parent=0 // pred_check
    _
  $region27: #{encoder_layer_forward.7} parent=0 // pred_check_branch
    %135 = sbr.rel (0) target = $region29
  $region28: #{encoder_layer_forward.7} parent=0 // pred_region
    _
  $region29: #{encoder_layer_forward.7} parent=0 // pred_fallthru
    _

// kernel: encoder_layer_forward.8
$region0: #{encoder_layer_forward.8}
  #allocation0 [shape = 'u32[]', space=smem, size = 0x4, offset = 0x4, fixed_abs, tag = 'smem constant byte address 0x4 - core index']
  #allocation1 [shape = 'u32[144,128]{1,0:T(1,128)}', space=vmem, size = 0x12000, scoped, tag = 'internal scratch']
  #allocation2 [shape = 'f32[8,1]{1,0:T(8,128)}', space=vmem, size = 0x1000, scoped, tag = 'scratch operand']
  #allocation3 [shape = 'f32[8,1]{1,0:T(8,128)}', space=vmem, size = 0x1000, scoped, tag = 'scratch operand']
  #allocation4 [shape = 'f32[8,8]{1,0:T(8,128)}', space=vmem, size = 0x1000, scoped, tag = 'scratch operand']
  %s0 = inlined_call_operand.vmem [shape: f32[8,8,8], index: 0, kind: input, shape index: {}]
  %s1 = inlined_call_operand.vmem [shape: f32[8,8,8], index: 1, kind: input, shape index: {}]
  %s2 = inlined_call_operand.vmem [shape: f32[8,8,8], index: 2, kind: input, shape index: {}]
  %s3 = inlined_call_operand.vmem [shape: f32[8,8,8], index: 3, kind: output, shape index: {}]
  %s4 = sld [smem:[#allocation0]]
  $region53: #{encoder_layer_forward.8} parent=0
    _
  %s6 = ssub.s32 1, %s4
  %s7 = scalar_select 0, %s6, %s4
  loop: start=0, step=1, limit=10
  $region2: #{encoder_layer_forward.8} parent=0 // loop_pre_header
    _
  $region3: #{encoder_layer_forward.8} parent=0 // loop_header
    %s9 = sphi 0, %s13
    %p10 = scmp.ge.s32.totalorder %s9, 10
    %s16 = sphi 0, %s35
    %s17 = sphi 0, %s31
    %s18 = sphi 0, %s27
    %s19 = sphi 0, %s16
    %s20 = sphi 0, %s17
    %s21 = sphi 0, %s18
    %s22 = sphi 0, %s19
    %s23 = sphi 0, %s20
    %s24 = sphi 0, %s21
    %s40 = sphi 0, %s42
    %s43 = sphi 0, %s40
    %s44 = sphi 0, %s43
    %s60 = sphi 0, %s44
    %s68 = sphi 0, %s70
    %s71 = sphi 0, %s68
    %s72 = sphi 0, %s71
    %s88 = sphi 0, %s72
    %s96 = sphi 0, %s98
    %s99 = sphi 0, %s96
    %s100 = sphi 0, %s99
    %s116 = sphi 0, %s100
    %s124 = sphi 0, %s126
    %s127 = sphi 0, %s124
    %s128 = sphi 0, %s127
    %s144 = sphi 0, %s128
  $region4: #{encoder_layer_forward.8} parent=0 // loop_header_branch
    %12 = sbr.rel (%p10) target = $region8
  $region5: #{encoder_layer_forward.8} parent=0 // loop_body
    %s14 = ssub.s32 %s9, 1
    %s15 = ssub.s32 %s9, 2
    %s25 = sadd.s32 1, %s18
    %p26 = scmp.ge.s32.totalorder %s25, 1
    %s27 = scalar_select %p26, 0, %s25
    %s28 = sadd.s32 1, %s17
    %s29 = scalar_select %p26, %s28, %s17
    %p30 = scmp.ge.s32.totalorder %s29, 1
    %s31 = scalar_select %p30, 0, %s29
    %s32 = sadd.s32 1, %s16
    %s33 = scalar_select %p30, %s32, %s16
    %p34 = scmp.ge.s32.totalorder %s33, 8
    %s35 = scalar_select %p34, 0, %s33
    %s36 = ssub.s32 %s16, %s35
    %s37 = ssub.s32 %s17, %s31
    %s38 = sor.u32 %s36, %s37
    %p39 = scmp.eq.s32.totalorder %s38, 0
    %s41 = sadd.s32 %s40, 1
    %s42 = scalar_select %p39, %s40, %s41
    %p45 = pneg %p39
    %p46 = scmp.eq.s32.totalorder %s9, 7
    %p47 = por %p45, %p46
    %p48 = scmp.ne.s32.totalorder %s40, %s43
    %p49 = scmp.eq.s32.totalorder %s9, 0
    %p50 = por %p48, %p49
    %p51 = scmp.ne.s32.totalorder %s40, %s43
    %p52 = scmp.eq.s32.totalorder %s14, 7
    %p53 = por %p51, %p52
    %p54 = scmp.ne.s32.totalorder %s43, %s44
    %p55 = scmp.eq.s32.totalorder %s14, 0
    %p56 = por %p54, %p55
    %p57 = scmp.ne.s32.totalorder %s43, %s44
    %p58 = scmp.eq.s32.totalorder %s15, 7
    %p59 = por %p57, %p58
    %p61 = scmp.ne.s32.totalorder %s44, %s60
    %p62 = scmp.eq.s32.totalorder %s15, 0
    %p63 = por %p61, %p62
    %s64 = ssub.s32 %s16, %s35
    %s65 = ssub.s32 %s18, %s27
    %s66 = sor.u32 %s64, %s65
    %p67 = scmp.eq.s32.totalorder %s66, 0
    %s69 = sadd.s32 %s68, 1
    %s70 = scalar_select %p67, %s68, %s69
    %p73 = pneg %p67
    %p74 = scmp.eq.s32.totalorder %s9, 7
    %p75 = por %p73, %p74
    %p76 = scmp.ne.s32.totalorder %s68, %s71
    %p77 = scmp.eq.s32.totalorder %s9, 0
    %p78 = por %p76, %p77
    %p79 = scmp.ne.s32.totalorder %s68, %s71
    %p80 = scmp.eq.s32.totalorder %s14, 7
    %p81 = por %p79, %p80
    %p82 = scmp.ne.s32.totalorder %s71, %s72
    %p83 = scmp.eq.s32.totalorder %s14, 0
    %p84 = por %p82, %p83
    %p85 = scmp.ne.s32.totalorder %s71, %s72
    %p86 = scmp.eq.s32.totalorder %s15, 7
    %p87 = por %p85, %p86
    %p89 = scmp.ne.s32.totalorder %s72, %s88
    %p90 = scmp.eq.s32.totalorder %s15, 0
    %p91 = por %p89, %p90
    %s92 = ssub.s32 %s16, %s35
    %s93 = ssub.s32 %s18, %s27
    %s94 = sor.u32 %s92, %s93
    %p95 = scmp.eq.s32.totalorder %s94, 0
    %s97 = sadd.s32 %s96, 1
    %s98 = scalar_select %p95, %s96, %s97
    %p101 = pneg %p95
    %p102 = scmp.eq.s32.totalorder %s9, 7
    %p103 = por %p101, %p102
    %p104 = scmp.ne.s32.totalorder %s96, %s99
    %p105 = scmp.eq.s32.totalorder %s9, 0
    %p106 = por %p104, %p105
    %p107 = scmp.ne.s32.totalorder %s96, %s99
    %p108 = scmp.eq.s32.totalorder %s14, 7
    %p109 = por %p107, %p108
    %p110 = scmp.ne.s32.totalorder %s99, %s100
    %p111 = scmp.eq.s32.totalorder %s14, 0
    %p112 = por %p110, %p111
    %p113 = scmp.ne.s32.totalorder %s99, %s100
    %p114 = scmp.eq.s32.totalorder %s15, 7
    %p115 = por %p113, %p114
    %p117 = scmp.ne.s32.totalorder %s100, %s116
    %p118 = scmp.eq.s32.totalorder %s15, 0
    %p119 = por %p117, %p118
    %s120 = ssub.s32 %s16, %s35
    %s121 = ssub.s32 %s17, %s31
    %s122 = sor.u32 %s120, %s121
    %p123 = scmp.eq.s32.totalorder %s122, 0
    %s125 = sadd.s32 %s124, 1
    %s126 = scalar_select %p123, %s124, %s125
    %p129 = pneg %p123
    %p130 = scmp.eq.s32.totalorder %s9, 7
    %p131 = por %p129, %p130
    %p132 = scmp.ne.s32.totalorder %s124, %s127
    %p133 = scmp.eq.s32.totalorder %s9, 0
    %p134 = por %p132, %p133
    %p135 = scmp.ne.s32.totalorder %s124, %s127
    %p136 = scmp.eq.s32.totalorder %s14, 7
    %p137 = por %p135, %p136
    %p138 = scmp.ne.s32.totalorder %s127, %s128
    %p139 = scmp.eq.s32.totalorder %s14, 0
    %p140 = por %p138, %p139
    %p141 = scmp.ne.s32.totalorder %s127, %s128
    %p142 = scmp.eq.s32.totalorder %s15, 7
    %p143 = por %p141, %p142
    %p145 = scmp.ne.s32.totalorder %s128, %s144
    %p146 = scmp.eq.s32.totalorder %s15, 0
    %p147 = por %p145, %p146
    %p148 = scmp.le.s32.totalorder 1, %s9
    %p149 = scmp.lt.s32.totalorder %s9, 9
    %p150 = pnand %p148, %p149
    %p151 = pneg %p150
    // Predicated region
    $region9: #{encoder_layer_forward.8} parent=5 // pred_check
      _
    $region10: #{encoder_layer_forward.8} parent=5 // pred_check_branch
      %153 = sbr.rel (%p150) target = $region12
    $region11: #{encoder_layer_forward.8} parent=5 // pred_region
      %s154 = ssub.s32 %s9, 1
    $region12: #{encoder_layer_forward.8} parent=5 // pred_fallthru
      _
    %p155 = scmp.lt.s32.totalorder %s9, 8
    // Predicated region
    $region13: #{encoder_layer_forward.8} parent=5 // pred_check
      %p156 = pneg %p155
    $region14: #{encoder_layer_forward.8} parent=5 // pred_check_branch
      %158 = sbr.rel (%p156) target = $region16
    $region15: #{encoder_layer_forward.8} parent=5 // pred_region
      // Predicated region
      $region17: #{encoder_layer_forward.8} parent=15 // pred_check
        %p159 = pneg %p50
      $region18: #{encoder_layer_forward.8} parent=15 // pred_check_branch
        %161 = sbr.rel (%p159) target = $region20
      $region19: #{encoder_layer_forward.8} parent=15 // pred_region
        %p162 = scmp.lt.s32.totalorder %s16, 7
        %s163 = scalar_select %p162, %s16, 7
        %p164 = scmp.lt.s32.totalorder %s17, 0
        %s165 = scalar_select %p164, %s17, 0
        %s166 = sadd.s32 %s165, %s163
        %s167 = smul.addr %s166, 8
        %s168 = scalar_lea.vmem %s0, %s167
      $region20: #{encoder_layer_forward.8} parent=15 // pred_fallthru
        _
      // Predicated region
      $region21: #{encoder_layer_forward.8} parent=15 // pred_check
        %p169 = pneg %p78
      $region22: #{encoder_layer_forward.8} parent=15 // pred_check_branch
        %171 = sbr.rel (%p169) target = $region24
      $region23: #{encoder_layer_forward.8} parent=15 // pred_region
        %p172 = scmp.lt.s32.totalorder %s16, 7
        %s173 = scalar_select %p172, %s16, 7
        %p174 = scmp.lt.s32.totalorder %s18, 0
        %s175 = scalar_select %p174, %s18, 0
        %s176 = sadd.s32 %s175, %s173
        %s177 = smul.addr %s176, 8
        %s178 = scalar_lea.vmem %s1, %s177
      $region24: #{encoder_layer_forward.8} parent=15 // pred_fallthru
        _
      // Predicated region
      $region25: #{encoder_layer_forward.8} parent=15 // pred_check
        %p179 = pneg %p106
      $region26: #{encoder_layer_forward.8} parent=15 // pred_check_branch
        %181 = sbr.rel (%p179) target = $region28
      $region27: #{encoder_layer_forward.8} parent=15 // pred_region
        %p182 = scmp.lt.s32.totalorder %s16, 7
        %s183 = scalar_select %p182, %s16, 7
        %p184 = scmp.lt.s32.totalorder %s18, 0
        %s185 = scalar_select %p184, %s18, 0
        %s186 = sadd.s32 %s185, %s183
        %s187 = smul.addr %s186, 8
        %s188 = scalar_lea.vmem %s2, %s187
      $region28: #{encoder_layer_forward.8} parent=15 // pred_fallthru
        _
    $region16: #{encoder_layer_forward.8} parent=5 // pred_fallthru
      _
    %p189 = scmp.le.s32.totalorder 1, %s9
    %p190 = scmp.lt.s32.totalorder %s9, 9
    %p191 = pnand %p189, %p190
    %p192 = pneg %p191
    // Predicated region
    $region29: #{encoder_layer_forward.8} parent=5 // pred_check
      _
    $region30: #{encoder_layer_forward.8} parent=5 // pred_check_branch
      %194 = sbr.rel (%p191) target = $region32
    $region31: #{encoder_layer_forward.8} parent=5 // pred_region
      %s195 = ssub.s32 %s9, 1
      %p196 = scmp.lt.s32.totalorder %s19, 7
      %s197 = scalar_select %p196, %s19, 7
      %p198 = scmp.lt.s32.totalorder %s20, 0
      %s199 = scalar_select %p198, %s20, 0
      %s200 = sadd.s32 %s199, %s197
      %s201 = smul.addr %s200, 8
      %s202 = scalar_lea.vmem %s0, %s201
      %p203 = pneg %p56
      %p204 = pneg %p53
      %p205 = scmp.lt.s32.totalorder %s19, 7
      %s206 = scalar_select %p205, %s19, 7
      %p207 = scmp.lt.s32.totalorder %s21, 0
      %s208 = scalar_select %p207, %s21, 0
      %s209 = sadd.s32 %s208, %s206
      %s210 = smul.addr %s209, 8
      %s211 = scalar_lea.vmem %s1, %s210
      %p212 = pneg %p84
      %p213 = pneg %p81
      %p214 = scmp.lt.s32.totalorder %s19, 7
      %s215 = scalar_select %p214, %s19, 7
      %p216 = scmp.lt.s32.totalorder %s21, 0
      %s217 = scalar_select %p216, %s21, 0
      %s218 = sadd.s32 %s217, %s215
      %s219 = smul.addr %s218, 8
      %s220 = scalar_lea.vmem %s2, %s219
      %p221 = pneg %p112
      %p222 = pneg %p109
      %p223 = pneg %p140
      %p224 = pneg %p137
      %p225 = scmp.lt.s32.totalorder %s19, 7
      %s226 = scalar_select %p225, %s19, 7
      %p227 = scmp.lt.s32.totalorder %s20, 0
      %s228 = scalar_select %p227, %s20, 0
      %s229 = sadd.s32 %s228, %s226
      %s230 = smul.addr %s229, 8
      %s231 = scalar_lea.vmem %s3, %s230
      %p232 = scmp.lt.s32.totalorder %s19, 7
      %s233 = scalar_select %p232, %s19, 7
      %p234 = scmp.lt.s32.totalorder %s20, 0
      %s235 = scalar_select %p234, %s20, 0
      %s236 = sadd.s32 %s235, %s233
      %s237 = smul.addr %s236, 8
      %s238 = scalar_lea.vmem %s0, %s237
      %p239 = scmp.lt.s32.totalorder %s19, 7
      %s240 = scalar_select %p239, %s19, 7
      %p241 = scmp.lt.s32.totalorder %s21, 0
      %s242 = scalar_select %p241, %s21, 0
      %s243 = sadd.s32 %s242, %s240
      %s244 = smul.addr %s243, 8
      %s245 = scalar_lea.vmem %s1, %s244
      %p246 = scmp.lt.s32.totalorder %s19, 7
      %s247 = scalar_select %p246, %s19, 7
      %p248 = scmp.lt.s32.totalorder %s21, 0
      %s249 = scalar_select %p248, %s21, 0
      %s250 = sadd.s32 %s249, %s247
      %s251 = smul.addr %s250, 8
      %s252 = scalar_lea.vmem %s2, %s251
      %p253 = scmp.lt.s32.totalorder %s19, 7
      %s254 = scalar_select %p253, %s19, 7
      %p255 = scmp.lt.s32.totalorder %s20, 0
      %s256 = scalar_select %p255, %s20, 0
      %s257 = sadd.s32 %s256, %s254
      %s258 = smul.addr %s257, 8
      %s259 = scalar_lea.vmem %s3, %s258
      %p260 = scmp.eq.s32.totalorder %s21, 0
      // Predicated region
      $region33: #{encoder_layer_forward.8} parent=31 // pred_check
        %p261 = pneg %p260
      $region34: #{encoder_layer_forward.8} parent=31 // pred_check_branch
        %263 = sbr.rel (%p261) target = $region36
      $region35: #{encoder_layer_forward.8} parent=31 // pred_region
        %vm264 = vcmask 7168
        %265 = vst.msk [vmem:[#allocation2] sm:$0xff] %vm264, -inf
        %266 = vst.msk [vmem:[#allocation3] sm:$0xff] %vm264, 0.0
        %vm267 = vcmask 64512
        %268 = vst.msk [vmem:[#allocation4] sm:$0xff] %vm267, 0.0
      $region36: #{encoder_layer_forward.8} parent=31 // pred_fallthru
        _
      %v269 = vld [vmem:[%s238] sm:$0xff]
      %v270 = vld [vmem:[%s245] sm:$0xff]
      %v271 = vld [vmem:[%s252] sm:$0xff]
      %vm272 = vcmask 64512
      %v274 = vsel %vm272, %v269, 0
      %v277 = vsel %vm272, %v270, 0
      %279 = vmatprep.subr.mxu0 0.0
      %280 = vmatpush1.xpose.msra.mxu0 0.0
      %281 = vmatprep.subr.mxu0 0.0
      %282 = vmatpush1.xpose.msra.mxu0 0.0
      %283 = vmatprep.subr.mxu0 0.0
      %284 = vmatpush1.xpose.msra.mxu0 0.0
      %285 = vmatprep.subr.mxu0 0.0
      %286 = vmatpush1.xpose.msra.mxu0 0.0
      %287 = vmatprep.subr.mxu0 0.0
      %288 = vmatpush1.xpose.msra.mxu0 0.0
      %289 = vmatprep.subr.mxu0 0.0
      %290 = vmatpush1.xpose.msra.mxu0 0.0
      %291 = vmatprep.subr.mxu0 0.0
      %292 = vmatpush1.xpose.msra.mxu0 0.0
      %293 = vmatprep.subr.mxu0 0.0
      %294 = vmatpush1.xpose.msra.mxu0 0.0
      %295 = vmatprep.subr.mxu0 0.0
      %296 = vmatpush1.xpose.msra.mxu0 0.0
      %297 = vmatprep.subr.mxu0 0.0
      %298 = vmatpush1.xpose.msra.mxu0 0.0
      %299 = vmatprep.subr.mxu0 0.0
      %300 = vmatpush1.xpose.msra.mxu0 0.0
      %301 = vmatprep.subr.mxu0 0.0
      %302 = vmatpush1.xpose.msra.mxu0 0.0
      %303 = vmatprep.subr.mxu0 0.0
      %304 = vmatpush1.xpose.msra.mxu0 0.0
      %305 = vmatprep.subr.mxu0 0.0
      %306 = vmatpush1.xpose.msra.mxu0 0.0
      %307 = vmatprep.subr.mxu0 0.0
      %308 = vmatpush1.xpose.msra.mxu0 0.0
      %309 = vmatprep.subr.mxu0 0.0
      %310 = vmatpush1.xpose.msra.mxu0 %v277
      %311 = vmatprep.subr.mxu0 0.0
      %312 = vmatpush2.xpose.msra.mxu0 0.0
      %313 = vmatprep.subr.mxu0 0.0
      %314 = vmatpush2.xpose.msra.mxu0 0.0
      %315 = vmatprep.subr.mxu0 0.0
      %316 = vmatpush2.xpose.msra.mxu0 0.0
      %317 = vmatprep.subr.mxu0 0.0
      %318 = vmatpush2.xpose.msra.mxu0 0.0
      %319 = vmatprep.subr.mxu0 0.0
      %320 = vmatpush2.xpose.msra.mxu0 0.0
      %321 = vmatprep.subr.mxu0 0.0
      %322 = vmatpush2.xpose.msra.mxu0 0.0
      %323 = vmatprep.subr.mxu0 0.0
      %324 = vmatpush2.xpose.msra.mxu0 0.0
      %325 = vmatprep.subr.mxu0 0.0
      %326 = vmatpush2.xpose.msra.mxu0 0.0
      %327 = vmatprep.subr.mxu0 0.0
      %328 = vmatpush2.xpose.msra.mxu0 0.0
      %329 = vmatprep.subr.mxu0 0.0
      %330 = vmatpush2.xpose.msra.mxu0 0.0
      %331 = vmatprep.subr.mxu0 0.0
      %332 = vmatpush2.xpose.msra.mxu0 0.0
      %333 = vmatprep.subr.mxu0 0.0
      %334 = vmatpush2.xpose.msra.mxu0 0.0
      %335 = vmatprep.subr.mxu0 0.0
      %336 = vmatpush2.xpose.msra.mxu0 0.0
      %337 = vmatprep.subr.mxu0 0.0
      %338 = vmatpush2.xpose.msra.mxu0 0.0
      %339 = vmatprep.subr.mxu0 0.0
      %340 = vmatpush2.xpose.msra.mxu0 0.0
      %341 = vmatprep.subr.mxu0 0.0
      %342 = vmatpush2.xpose.msra.mxu0 0.0
      %343 = vmatprep.mubr.f32.mxu0 0.0
      %344 = vmatmul.mubr.f32.gmra.mxu0 %v274
      %v345 = vpop.f32.mrf.mxu0
      %v346 = vadd.f32 0.0, %v345
      %v347 = vpop.f32.mrf.mxu0
      %348 = vdwg.mxu0
      %v349 = vmul.f32 %v346, 0.35355338
      %v350 = vld [vmem:[#allocation2] sm:$0xff]
      %v351 = vsel %vm272, %v349, -inf
      %352 = vmax.xlane.f32.xlu0 %v351
      %v353 = vpop.xlane.xlu0 %352
      %v354 = vmax.f32 %v350, %v353
      %v355 = vsub.f32 %v350, %v354
      %v356 = vmul.f32 %v355, 1.442695
      %v357 = vpow.pop %v356
      %359 = vset.pattern.permute.xlu0 0
      %360 = vperm.xlu0 %359, %v354
      %v361 = vpop.permute.xlu0 %360
      %v363 = vsub.f32 %v349, %v361
      %v364 = vmul.f32 %v363, 1.442695
      %v365 = vpow.pop %v364
      %v367 = vsel %vm272, %v365, 0
      %369 = vmatprep.subr.mxu0 0.0
      %370 = vmatpush1.msra.mxu0 0.0
      %371 = vmatprep.subr.mxu0 0.0
      %372 = vmatpush1.msra.mxu0 0.0
      %373 = vmatprep.subr.mxu0 0.0
      %374 = vmatpush1.msra.mxu0 0.0
      %375 = vmatprep.subr.mxu0 0.0
      %376 = vmatpush1.msra.mxu0 0.0
      %377 = vmatprep.subr.mxu0 0.0
      %378 = vmatpush1.msra.mxu0 0.0
      %379 = vmatprep.subr.mxu0 0.0
      %380 = vmatpush1.msra.mxu0 0.0
      %381 = vmatprep.subr.mxu0 0.0
      %382 = vmatpush1.msra.mxu0 0.0
      %383 = vmatprep.subr.mxu0 0.0
      %384 = vmatpush1.msra.mxu0 0.0
      %385 = vmatprep.subr.mxu0 0.0
      %386 = vmatpush1.msra.mxu0 0.0
      %387 = vmatprep.subr.mxu0 0.0
      %388 = vmatpush1.msra.mxu0 0.0
      %389 = vmatprep.subr.mxu0 0.0
      %390 = vmatpush1.msra.mxu0 0.0
      %391 = vmatprep.subr.mxu0 0.0
      %392 = vmatpush1.msra.mxu0 0.0
      %393 = vmatprep.subr.mxu0 0.0
      %394 = vmatpush1.msra.mxu0 0.0
      %395 = vmatprep.subr.mxu0 0.0
      %396 = vmatpush1.msra.mxu0 0.0
      %397 = vmatprep.subr.mxu0 0.0
      %398 = vmatpush1.msra.mxu0 0.0
      %399 = vmatprep.subr.mxu0 0.0
      %400 = vmatpush1.msra.mxu0 %v271
      %401 = vmatprep.subr.mxu0 0.0
      %402 = vmatpush2.msra.mxu0 0.0
      %403 = vmatprep.subr.mxu0 0.0
      %404 = vmatpush2.msra.mxu0 0.0
      %405 = vmatprep.subr.mxu0 0.0
      %406 = vmatpush2.msra.mxu0 0.0
      %407 = vmatprep.subr.mxu0 0.0
      %408 = vmatpush2.msra.mxu0 0.0
      %409 = vmatprep.subr.mxu0 0.0
      %410 = vmatpush2.msra.mxu0 0.0
      %411 = vmatprep.subr.mxu0 0.0
      %412 = vmatpush2.msra.mxu0 0.0
      %413 = vmatprep.subr.mxu0 0.0
      %414 = vmatpush2.msra.mxu0 0.0
      %415 = vmatprep.subr.mxu0 0.0
      %416 = vmatpush2.msra.mxu0 0.0
      %417 = vmatprep.subr.mxu0 0.0
      %418 = vmatpush2.msra.mxu0 0.0
      %419 = vmatprep.subr.mxu0 0.0
      %420 = vmatpush2.msra.mxu0 0.0
      %421 = vmatprep.subr.mxu0 0.0
      %422 = vmatpush2.msra.mxu0 0.0
      %423 = vmatprep.subr.mxu0 0.0
      %424 = vmatpush2.msra.mxu0 0.0
      %425 = vmatprep.subr.mxu0 0.0
      %426 = vmatpush2.msra.mxu0 0.0
      %427 = vmatprep.subr.mxu0 0.0
      %428 = vmatpush2.msra.mxu0 0.0
      %429 = vmatprep.subr.mxu0 0.0
      %430 = vmatpush2.msra.mxu0 0.0
      %431 = vmatprep.subr.mxu0 0.0
      %432 = vmatpush2.msra.mxu0 0.0
      %433 = vmatprep.mubr.f32.mxu0 0.0
      %434 = vmatmul.mubr.f32.gmra.mxu0 %v367
      %v435 = vpop.f32.mrf.mxu0
      %v436 = vadd.f32 0.0, %v435
      %v437 = vpop.f32.mrf.mxu0
      %438 = vdwg.mxu0
      %v439 = vld [vmem:[#allocation3] sm:$0xff]
      %v440 = vmul.f32 %v357, %v439
      %v441 = vsel %vm272, %v365, 0.0
      %442 = vadd.xlane.f32.xlu0 %v441
      %v443 = vpop.xlane.xlu0 %442
      %v444 = vadd.f32 %v440, %v443
      %vm445 = vcmask 7168
      %446 = vst.msk [vmem:[#allocation3] sm:$0xff] %vm445, %v444
      %v447 = vld [vmem:[#allocation4] sm:$0xff]
      %449 = vset.pattern.permute.xlu0 0
      %450 = vperm.xlu0 %449, %v357
      %v451 = vpop.permute.xlu0 %450
      %v453 = vmul.f32 %v451, %v447
      %v454 = vadd.f32 %v453, %v436
      %455 = vst.msk [vmem:[#allocation4] sm:$0xff] %vm272, %v454
      %456 = vst.msk [vmem:[#allocation2] sm:$0xff] %vm445, %v354
      // Predicated region
      $region37: #{encoder_layer_forward.8} parent=31 // pred_check
        %p457 = pneg %p260
      $region38: #{encoder_layer_forward.8} parent=31 // pred_check_branch
        %459 = sbr.rel (%p457) target = $region40
      $region39: #{encoder_layer_forward.8} parent=31 // pred_region
        %v460 = vld [vmem:[#allocation4] sm:$0xff]
        %v461 = vld [vmem:[#allocation3] sm:$0xff]
        %v462 = vrcp.pop %v461
        %464 = vset.pattern.permute.xlu0 0
        %465 = vperm.xlu0 %464, %v462
        %v466 = vpop.permute.xlu0 %465
        %v468 = vmul.f32 %v460, %v466
        %469 = vst.msk [vmem:[%s259] sm:$0xff] %vm272, %v468
      $region40: #{encoder_layer_forward.8} parent=31 // pred_fallthru
        _
      %p470 = scmp.lt.s32.totalorder %s19, 7
      %s471 = scalar_select %p470, %s19, 7
      %p472 = scmp.lt.s32.totalorder %s20, 0
      %s473 = scalar_select %p472, %s20, 0
      %s474 = sadd.s32 %s473, %s471
      %s475 = smul.addr %s474, 8
      %s476 = scalar_lea.vmem %s3, %s475
      // Predicated region
      $region41: #{encoder_layer_forward.8} parent=31 // pred_check
        %p477 = pneg %p137
      $region42: #{encoder_layer_forward.8} parent=31 // pred_check_branch
        %479 = sbr.rel (%p477) target = $region44
      $region43: #{encoder_layer_forward.8} parent=31 // pred_region
        _
      $region44: #{encoder_layer_forward.8} parent=31 // pred_fallthru
        _
    $region32: #{encoder_layer_forward.8} parent=5 // pred_fallthru
      _
    %p480 = scmp.le.s32.totalorder 2, %s9
    // Predicated region
    $region45: #{encoder_layer_forward.8} parent=5 // pred_check
      %p481 = pneg %p480
    $region46: #{encoder_layer_forward.8} parent=5 // pred_check_branch
      %483 = sbr.rel (%p481) target = $region48
    $region47: #{encoder_layer_forward.8} parent=5 // pred_region
      %s484 = ssub.s32 %s9, 2
      // Predicated region
      $region49: #{encoder_layer_forward.8} parent=47 // pred_check
        %p485 = pneg %p143
      $region50: #{encoder_layer_forward.8} parent=47 // pred_check_branch
        %487 = sbr.rel (%p485) target = $region52
      $region51: #{encoder_layer_forward.8} parent=47 // pred_region
        %p488 = scmp.lt.s32.totalorder %s22, 7
        %s489 = scalar_select %p488, %s22, 7
        %p490 = scmp.lt.s32.totalorder %s23, 0
        %s491 = scalar_select %p490, %s23, 0
        %s492 = sadd.s32 %s491, %s489
        %s493 = smul.addr %s492, 8
        %s494 = scalar_lea.vmem %s3, %s493
      $region52: #{encoder_layer_forward.8} parent=47 // pred_fallthru
        _
    $region48: #{encoder_layer_forward.8} parent=5 // pred_fallthru
      _
  $region6: #{encoder_layer_forward.8} parent=0 // loop_footer
    %s13 = sadd.s32 1, %s9
  $region7: #{encoder_layer_forward.8} parent=0 // loop_footer_branch
    %8 = sbr.rel target = $region3
  $region8: #{encoder_layer_forward.8} parent=0 // loop_exit
    _

// kernel: encoder_layer_forward.9
$region0: #{encoder_layer_forward.9}
  #allocation0 [shape = 'u32[]', space=smem, size = 0x4, offset = 0x4, fixed_abs, tag = 'smem constant byte address 0x4 - core index']
  #allocation1 [shape = 'u32[144,128]{1,0:T(1,128)}', space=vmem, size = 0x12000, scoped, tag = 'internal scratch']
  #allocation2 [shape = 'f32[16,32]{1,0:T(8,128)}', space=vmem, size = 0x2000, scoped, tag = 'scratch operand']
  %s0 = inlined_call_operand.vmem [shape: f32[16,32], index: 0, kind: input, shape index: {}]
  %s1 = inlined_call_operand.vmem [shape: f32[32,32], index: 1, kind: input, shape index: {}]
  %s2 = inlined_call_operand.vmem [shape: f32[1,32], index: 2, kind: input, shape index: {}]
  %s3 = inlined_call_operand.vmem [shape: f32[16,32], index: 3, kind: input, shape index: {}]
  %s4 = inlined_call_operand.vmem [shape: f32[1,32], index: 4, kind: input, shape index: {}]
  %s5 = inlined_call_operand.vmem [shape: f32[1,32], index: 5, kind: input, shape index: {}]
  %s6 = inlined_call_operand.vmem [shape: f32[16,32], index: 6, kind: output, shape index: {0}]
  %s7 = inlined_call_operand.vmem [shape: f32[16,32], index: 7, kind: output, shape index: {1}]
  %8 = xla_tuple %s6, %s7
  %s9 = sld [smem:[#allocation0]]
  $region50: #{encoder_layer_forward.9} parent=0
    _
  %s11 = ssub.s32 1, %s9
  %s12 = scalar_select 0, %s11, %s9
  // Predicated region
  $region2: #{encoder_layer_forward.9} parent=0 // pred_check
    _
  $region3: #{encoder_layer_forward.9} parent=0 // pred_check_branch
    %14 = sbr.rel (0) target = $region5
  $region4: #{encoder_layer_forward.9} parent=0 // pred_region
    _
  $region5: #{encoder_layer_forward.9} parent=0 // pred_fallthru
    _
  // Predicated region
  $region6: #{encoder_layer_forward.9} parent=0 // pred_check
    _
  $region7: #{encoder_layer_forward.9} parent=0 // pred_check_branch
    %16 = sbr.rel (0) target = $region9
  $region8: #{encoder_layer_forward.9} parent=0 // pred_region
    _
  $region9: #{encoder_layer_forward.9} parent=0 // pred_fallthru
    _
  // Predicated region
  $region10: #{encoder_layer_forward.9} parent=0 // pred_check
    _
  $region11: #{encoder_layer_forward.9} parent=0 // pred_check_branch
    %18 = sbr.rel (0) target = $region13
  $region12: #{encoder_layer_forward.9} parent=0 // pred_region
    _
  $region13: #{encoder_layer_forward.9} parent=0 // pred_fallthru
    _
  // Predicated region
  $region14: #{encoder_layer_forward.9} parent=0 // pred_check
    _
  $region15: #{encoder_layer_forward.9} parent=0 // pred_check_branch
    %20 = sbr.rel (0) target = $region17
  $region16: #{encoder_layer_forward.9} parent=0 // pred_region
    _
  $region17: #{encoder_layer_forward.9} parent=0 // pred_fallthru
    _
  // Predicated region
  $region18: #{encoder_layer_forward.9} parent=0 // pred_check
    _
  $region19: #{encoder_layer_forward.9} parent=0 // pred_check_branch
    %22 = sbr.rel (0) target = $region21
  $region20: #{encoder_layer_forward.9} parent=0 // pred_region
    _
  $region21: #{encoder_layer_forward.9} parent=0 // pred_fallthru
    _
  // Predicated region
  $region22: #{encoder_layer_forward.9} parent=0 // pred_check
    _
  $region23: #{encoder_layer_forward.9} parent=0 // pred_check_branch
    %24 = sbr.rel (0) target = $region25
  $region24: #{encoder_layer_forward.9} parent=0 // pred_region
    _
  $region25: #{encoder_layer_forward.9} parent=0 // pred_fallthru
    _
  %p25 = scmp.eq.s32.totalorder 0, 0
  // Predicated region
  $region26: #{encoder_layer_forward.9} parent=0 // pred_check
    %p26 = pneg %p25
  $region27: #{encoder_layer_forward.9} parent=0 // pred_check_branch
    %28 = sbr.rel (%p26) target = $region29
  $region28: #{encoder_layer_forward.9} parent=0 // pred_region
    %vm29 = vcmask 261120
    %30 = vst.msk [vmem:[#allocation2] sm:$0xff] %vm29, 0.0
    %31 = vst.msk [vmem:[#allocation2 + $0x8] sm:$0xff] %vm29, 0.0
  $region29: #{encoder_layer_forward.9} parent=0 // pred_fallthru
    _
  %v32 = vld [vmem:[%s0] sm:$0xff]
  %v33 = vld [vmem:[%s0 + $0x8] sm:$0xff]
  %v34 = vld [vmem:[%s1] sm:$0xff]
  %v35 = vld [vmem:[%s1 + $0x8] sm:$0xff]
  %v36 = vld [vmem:[%s1 + $0x10] sm:$0xff]
  %v37 = vld [vmem:[%s1 + $0x18] sm:$0xff]
  %v38 = vld [vmem:[#allocation2] sm:$0xff]
  %v39 = vld [vmem:[#allocation2 + $0x8] sm:$0xff]
  %vm40 = vcmask 261120
  %v42 = vsel %vm40, %v32, 0
  %v45 = vsel %vm40, %v33, 0
  %47 = vmatprep.subr.mxu0 0.0
  %48 = vmatpush1.msra.mxu0 0.0
  %49 = vmatprep.subr.mxu0 0.0
  %50 = vmatpush1.msra.mxu0 0.0
  %51 = vmatprep.subr.mxu0 0.0
  %52 = vmatpush1.msra.mxu0 0.0
  %53 = vmatprep.subr.mxu0 0.0
  %54 = vmatpush1.msra.mxu0 0.0
  %55 = vmatprep.subr.mxu0 0.0
  %56 = vmatpush1.msra.mxu0 0.0
  %57 = vmatprep.subr.mxu0 0.0
  %58 = vmatpush1.msra.mxu0 0.0
  %59 = vmatprep.subr.mxu0 0.0
  %60 = vmatpush1.msra.mxu0 0.0
  %61 = vmatprep.subr.mxu0 0.0
  %62 = vmatpush1.msra.mxu0 0.0
  %63 = vmatprep.subr.mxu0 0.0
  %64 = vmatpush1.msra.mxu0 0.0
  %65 = vmatprep.subr.mxu0 0.0
  %66 = vmatpush1.msra.mxu0 0.0
  %67 = vmatprep.subr.mxu0 0.0
  %68 = vmatpush1.msra.mxu0 0.0
  %69 = vmatprep.subr.mxu0 0.0
  %70 = vmatpush1.msra.mxu0 0.0
  %71 = vmatprep.subr.mxu0 0.0
  %72 = vmatpush1.msra.mxu0 %v37
  %73 = vmatprep.subr.mxu0 0.0
  %74 = vmatpush1.msra.mxu0 %v36
  %75 = vmatprep.subr.mxu0 0.0
  %76 = vmatpush1.msra.mxu0 %v35
  %77 = vmatprep.subr.mxu0 0.0
  %78 = vmatpush1.msra.mxu0 %v34
  %79 = vmatprep.subr.mxu0 0.0
  %80 = vmatpush2.msra.mxu0 0.0
  %81 = vmatprep.subr.mxu0 0.0
  %82 = vmatpush2.msra.mxu0 0.0
  %83 = vmatprep.subr.mxu0 0.0
  %84 = vmatpush2.msra.mxu0 0.0
  %85 = vmatprep.subr.mxu0 0.0
  %86 = vmatpush2.msra.mxu0 0.0
  %87 = vmatprep.subr.mxu0 0.0
  %88 = vmatpush2.msra.mxu0 0.0
  %89 = vmatprep.subr.mxu0 0.0
  %90 = vmatpush2.msra.mxu0 0.0
  %91 = vmatprep.subr.mxu0 0.0
  %92 = vmatpush2.msra.mxu0 0.0
  %93 = vmatprep.subr.mxu0 0.0
  %94 = vmatpush2.msra.mxu0 0.0
  %95 = vmatprep.subr.mxu0 0.0
  %96 = vmatpush2.msra.mxu0 0.0
  %97 = vmatprep.subr.mxu0 0.0
  %98 = vmatpush2.msra.mxu0 0.0
  %99 = vmatprep.subr.mxu0 0.0
  %100 = vmatpush2.msra.mxu0 0.0
  %101 = vmatprep.subr.mxu0 0.0
  %102 = vmatpush2.msra.mxu0 0.0
  %103 = vmatprep.subr.mxu0 0.0
  %104 = vmatpush2.msra.mxu0 0.0
  %105 = vmatprep.subr.mxu0 0.0
  %106 = vmatpush2.msra.mxu0 0.0
  %107 = vmatprep.subr.mxu0 0.0
  %108 = vmatpush2.msra.mxu0 0.0
  %109 = vmatprep.subr.mxu0 0.0
  %110 = vmatpush2.msra.mxu0 0.0
  %111 = vmatprep.mubr.f32.mxu0 0.0
  %112 = vmatmul.mubr.f32.gmra.mxu0 %v42
  %v113 = vpop.f32.mrf.mxu0
  %v114 = vadd.f32 0.0, %v113
  %v115 = vpop.f32.mrf.mxu0
  %116 = vmatprep.mubr.f32.mxu0 0.0
  %117 = vmatmul.mubr.f32.gmra.mxu0 %v45
  %v118 = vpop.f32.mrf.mxu0
  %v119 = vadd.f32 0.0, %v118
  %v120 = vpop.f32.mrf.mxu0
  %121 = vdwg.mxu0
  %v122 = vadd.f32 %v38, %v114
  %v123 = vadd.f32 %v39, %v119
  %124 = vst.msk [vmem:[#allocation2] sm:$0xff] %vm40, %v122
  %125 = vst.msk [vmem:[#allocation2 + $0x8] sm:$0xff] %vm40, %v123
  // Predicated region
  $region30: #{encoder_layer_forward.9} parent=0 // pred_check
    %p126 = pneg %p25
  $region31: #{encoder_layer_forward.9} parent=0 // pred_check_branch
    %128 = sbr.rel (%p126) target = $region33
  $region32: #{encoder_layer_forward.9} parent=0 // pred_region
    %v129 = vld [vmem:[#allocation2] sm:$0xff]
    %v130 = vld [vmem:[#allocation2 + $0x8] sm:$0xff]
    %v131 = vld [vmem:[%s2] sm:$0x1]
    %v133 = vlaneseq
    %v134 = vshrl.u32 %v133, 7
    %v135 = vsub.s32 0, %v134
    %v136 = vrot.slane %v131, %v135
    %v138 = vadd.f32 %v129, %v136
    %v139 = vadd.f32 %v130, %v136
    %v140 = vld [vmem:[%s3] sm:$0xff]
    %v141 = vld [vmem:[%s3 + $0x8] sm:$0xff]
    %v142 = vadd.f32 %v138, %v140
    %v143 = vadd.f32 %v139, %v141
    %144 = vst.msk [vmem:[%s6] sm:$0xff] %vm40, %v142
    %145 = vst.msk [vmem:[%s6 + $0x8] sm:$0xff] %vm40, %v143
    %v146 = vsel %vm40, %v142, 0.0
    %147 = vadd.xlane.f32.xlu0 %v146
    %v148 = vpop.xlane.xlu0 %147
    %v149 = vsel %vm40, %v143, 0.0
    %150 = vadd.xlane.f32.xlu0 %v149
    %v151 = vpop.xlane.xlu0 %150
    %v152 = vrcp.pop 32.0
    %v153 = vmul.f32 %v148, %v152
    %v154 = vmul.f32 %v151, %v152
    %v155 = vsub.f32 %v142, %v153
    %v156 = vsub.f32 %v143, %v154
    %v157 = vmul.f32 %v155, %v155
    %v158 = vmul.f32 %v156, %v156
    %v159 = vsel %vm40, %v157, 0.0
    %160 = vadd.xlane.f32.xlu0 %v159
    %v161 = vpop.xlane.xlu0 %160
    %v162 = vsel %vm40, %v158, 0.0
    %163 = vadd.xlane.f32.xlu0 %v162
    %v164 = vpop.xlane.xlu0 %163
    %v165 = vrcp.pop 31.0
    %v166 = vmul.f32 %v161, %v165
    %v167 = vmul.f32 %v164, %v165
    %v168 = vrsqrt.pop %v166
    %v169 = vmul.f32 %v166, %v168
    %vm170 = vcmp.eq.f32.partialorder %v166, inf
    %v171 = vsel %vm170, %v166, %v169
    %vm172 = vcmp.eq.f32.partialorder %v166, 0.0
    %v173 = vand.u32 %v166, 2147483648
    %v174 = vsel %vm172, %v173, %v171
    %v175 = vrsqrt.pop %v167
    %v176 = vmul.f32 %v167, %v175
    %vm177 = vcmp.eq.f32.partialorder %v167, inf
    %v178 = vsel %vm177, %v167, %v176
    %vm179 = vcmp.eq.f32.partialorder %v167, 0.0
    %v180 = vand.u32 %v167, 2147483648
    %v181 = vsel %vm179, %v180, %v178
    %v182 = vadd.f32 %v174, 1e-06
    %v183 = vadd.f32 %v181, 1e-06
    %v184 = vrcp.pop %v182
    %v185 = vrcp.pop %v183
    %v186 = vld [vmem:[%s4] sm:$0x1]
    %v187 = vld [vmem:[%s5] sm:$0x1]
    %v189 = vlaneseq
    %v190 = vshrl.u32 %v189, 7
    %v191 = vsub.s32 0, %v190
    %v192 = vrot.slane %v186, %v191
    %v194 = vmul.f32 %v192, %v184
    %v195 = vmul.f32 %v192, %v185
    %v196 = vmul.f32 %v155, %v194
    %v197 = vmul.f32 %v156, %v195
    %v199 = vlaneseq
    %v200 = vshrl.u32 %v199, 7
    %v201 = vsub.s32 0, %v200
    %v202 = vrot.slane %v187, %v201
    %v204 = vadd.f32 %v196, %v202
    %v205 = vadd.f32 %v197, %v202
    %206 = vst.msk [vmem:[%s7] sm:$0xff] %vm40, %v204
    %207 = vst.msk [vmem:[%s7 + $0x8] sm:$0xff] %vm40, %v205
  $region33: #{encoder_layer_forward.9} parent=0 // pred_fallthru
    _
  // Predicated region
  $region34: #{encoder_layer_forward.9} parent=0 // pred_check
    _
  $region35: #{encoder_layer_forward.9} parent=0 // pred_check_branch
    %209 = sbr.rel (0) target = $region37
  $region36: #{encoder_layer_forward.9} parent=0 // pred_region
    _
  $region37: #{encoder_layer_forward.9} parent=0 // pred_fallthru
    _
  // Predicated region
  $region38: #{encoder_layer_forward.9} parent=0 // pred_check
    _
  $region39: #{encoder_layer_forward.9} parent=0 // pred_check_branch
    %211 = sbr.rel (0) target = $region41
  $region40: #{encoder_layer_forward.9} parent=0 // pred_region
    _
  $region41: #{encoder_layer_forward.9} parent=0 // pred_fallthru
    _
  // Predicated region
  $region42: #{encoder_layer_forward.9} parent=0 // pred_check
    _
  $region43: #{encoder_layer_forward.9} parent=0 // pred_check_branch
    %213 = sbr.rel (0) target = $region45
  $region44: #{encoder_layer_forward.9} parent=0 // pred_region
    _
  $region45: #{encoder_layer_forward.9} parent=0 // pred_fallthru
    _
  // Predicated region
  $region46: #{encoder_layer_forward.9} parent=0 // pred_check
    _
  $region47: #{encoder_layer_forward.9} parent=0 // pred_check_branch
    %215 = sbr.rel (0) target = $region49
  $region48: #{encoder_layer_forward.9} parent=0 // pred_region
    _
  $region49: #{encoder_layer_forward.9} parent=0 // pred_fallthru
    _

// kernel: encoder_layer_forward.10
$region0: #{encoder_layer_forward.10}
  #allocation0 [shape = 'u32[]', space=smem, size = 0x4, offset = 0x4, fixed_abs, tag = 'smem constant byte address 0x4 - core index']
  #allocation1 [shape = 'u32[144,128]{1,0:T(1,128)}', space=vmem, size = 0x12000, scoped, tag = 'internal scratch']
  #allocation2 [shape = 'f32[16,64]{1,0:T(8,128)}', space=vmem, size = 0x2000, scoped, tag = 'scratch operand']
  %s0 = inlined_call_operand.vmem [shape: f32[16,32], index: 0, kind: input, shape index: {}]
  %s1 = inlined_call_operand.vmem [shape: f32[32,64], index: 1, kind: input, shape index: {}]
  %s2 = inlined_call_operand.vmem [shape: f32[1,64], index: 2, kind: input, shape index: {}]
  %s3 = inlined_call_operand.vmem [shape: f32[16,64], index: 3, kind: output, shape index: {}]
  %s4 = sld [smem:[#allocation0]]
  $region30: #{encoder_layer_forward.10} parent=0
    _
  %s6 = ssub.s32 1, %s4
  %s7 = scalar_select 0, %s6, %s4
  // Predicated region
  $region2: #{encoder_layer_forward.10} parent=0 // pred_check
    _
  $region3: #{encoder_layer_forward.10} parent=0 // pred_check_branch
    %9 = sbr.rel (0) target = $region5
  $region4: #{encoder_layer_forward.10} parent=0 // pred_region
    _
  $region5: #{encoder_layer_forward.10} parent=0 // pred_fallthru
    _
  // Predicated region
  $region6: #{encoder_layer_forward.10} parent=0 // pred_check
    _
  $region7: #{encoder_layer_forward.10} parent=0 // pred_check_branch
    %11 = sbr.rel (0) target = $region9
  $region8: #{encoder_layer_forward.10} parent=0 // pred_region
    _
  $region9: #{encoder_layer_forward.10} parent=0 // pred_fallthru
    _
  // Predicated region
  $region10: #{encoder_layer_forward.10} parent=0 // pred_check
    _
  $region11: #{encoder_layer_forward.10} parent=0 // pred_check_branch
    %13 = sbr.rel (0) target = $region13
  $region12: #{encoder_layer_forward.10} parent=0 // pred_region
    _
  $region13: #{encoder_layer_forward.10} parent=0 // pred_fallthru
    _
  %p14 = scmp.eq.s32.totalorder 0, 0
  // Predicated region
  $region14: #{encoder_layer_forward.10} parent=0 // pred_check
    %p15 = pneg %p14
  $region15: #{encoder_layer_forward.10} parent=0 // pred_check_branch
    %17 = sbr.rel (%p15) target = $region17
  $region16: #{encoder_layer_forward.10} parent=0 // pred_region
    %vm18 = vcmask 523264
    %19 = vst.msk [vmem:[#allocation2] sm:$0xff] %vm18, 0.0
    %20 = vst.msk [vmem:[#allocation2 + $0x8] sm:$0xff] %vm18, 0.0
  $region17: #{encoder_layer_forward.10} parent=0 // pred_fallthru
    _
  %v21 = vld [vmem:[%s0] sm:$0xff]
  %v22 = vld [vmem:[%s0 + $0x8] sm:$0xff]
  %v23 = vld [vmem:[%s1] sm:$0xff]
  %v24 = vld [vmem:[%s1 + $0x8] sm:$0xff]
  %v25 = vld [vmem:[%s1 + $0x10] sm:$0xff]
  %v26 = vld [vmem:[%s1 + $0x18] sm:$0xff]
  %v27 = vld [vmem:[#allocation2] sm:$0xff]
  %v28 = vld [vmem:[#allocation2 + $0x8] sm:$0xff]
  %vm29 = vcmask 261120
  %v31 = vsel %vm29, %v21, 0
  %v34 = vsel %vm29, %v22, 0
  %36 = vmatprep.subr.mxu0 0.0
  %37 = vmatpush1.msra.mxu0 0.0
  %38 = vmatprep.subr.mxu0 0.0
  %39 = vmatpush1.msra.mxu0 0.0
  %40 = vmatprep.subr.mxu0 0.0
  %41 = vmatpush1.msra.mxu0 0.0
  %42 = vmatprep.subr.mxu0 0.0
  %43 = vmatpush1.msra.mxu0 0.0
  %44 = vmatprep.subr.mxu0 0.0
  %45 = vmatpush1.msra.mxu0 0.0
  %46 = vmatprep.subr.mxu0 0.0
  %47 = vmatpush1.msra.mxu0 0.0
  %48 = vmatprep.subr.mxu0 0.0
  %49 = vmatpush1.msra.mxu0 0.0
  %50 = vmatprep.subr.mxu0 0.0
  %51 = vmatpush1.msra.mxu0 0.0
  %52 = vmatprep.subr.mxu0 0.0
  %53 = vmatpush1.msra.mxu0 0.0
  %54 = vmatprep.subr.mxu0 0.0
  %55 = vmatpush1.msra.mxu0 0.0
  %56 = vmatprep.subr.mxu0 0.0
  %57 = vmatpush1.msra.mxu0 0.0
  %58 = vmatprep.subr.mxu0 0.0
  %59 = vmatpush1.msra.mxu0 0.0
  %60 = vmatprep.subr.mxu0 0.0
  %61 = vmatpush1.msra.mxu0 %v26
  %62 = vmatprep.subr.mxu0 0.0
  %63 = vmatpush1.msra.mxu0 %v25
  %64 = vmatprep.subr.mxu0 0.0
  %65 = vmatpush1.msra.mxu0 %v24
  %66 = vmatprep.subr.mxu0 0.0
  %67 = vmatpush1.msra.mxu0 %v23
  %68 = vmatprep.subr.mxu0 0.0
  %69 = vmatpush2.msra.mxu0 0.0
  %70 = vmatprep.subr.mxu0 0.0
  %71 = vmatpush2.msra.mxu0 0.0
  %72 = vmatprep.subr.mxu0 0.0
  %73 = vmatpush2.msra.mxu0 0.0
  %74 = vmatprep.subr.mxu0 0.0
  %75 = vmatpush2.msra.mxu0 0.0
  %76 = vmatprep.subr.mxu0 0.0
  %77 = vmatpush2.msra.mxu0 0.0
  %78 = vmatprep.subr.mxu0 0.0
  %79 = vmatpush2.msra.mxu0 0.0
  %80 = vmatprep.subr.mxu0 0.0
  %81 = vmatpush2.msra.mxu0 0.0
  %82 = vmatprep.subr.mxu0 0.0
  %83 = vmatpush2.msra.mxu0 0.0
  %84 = vmatprep.subr.mxu0 0.0
  %85 = vmatpush2.msra.mxu0 0.0
  %86 = vmatprep.subr.mxu0 0.0
  %87 = vmatpush2.msra.mxu0 0.0
  %88 = vmatprep.subr.mxu0 0.0
  %89 = vmatpush2.msra.mxu0 0.0
  %90 = vmatprep.subr.mxu0 0.0
  %91 = vmatpush2.msra.mxu0 0.0
  %92 = vmatprep.subr.mxu0 0.0
  %93 = vmatpush2.msra.mxu0 0.0
  %94 = vmatprep.subr.mxu0 0.0
  %95 = vmatpush2.msra.mxu0 0.0
  %96 = vmatprep.subr.mxu0 0.0
  %97 = vmatpush2.msra.mxu0 0.0
  %98 = vmatprep.subr.mxu0 0.0
  %99 = vmatpush2.msra.mxu0 0.0
  %100 = vmatprep.mubr.f32.mxu0 0.0
  %101 = vmatmul.mubr.f32.gmra.mxu0 %v31
  %v102 = vpop.f32.mrf.mxu0
  %v103 = vadd.f32 0.0, %v102
  %v104 = vpop.f32.mrf.mxu0
  %105 = vmatprep.mubr.f32.mxu0 0.0
  %106 = vmatmul.mubr.f32.gmra.mxu0 %v34
  %v107 = vpop.f32.mrf.mxu0
  %v108 = vadd.f32 0.0, %v107
  %v109 = vpop.f32.mrf.mxu0
  %110 = vdwg.mxu0
  %v111 = vadd.f32 %v27, %v103
  %v112 = vadd.f32 %v28, %v108
  %vm113 = vcmask 523264
  %114 = vst.msk [vmem:[#allocation2] sm:$0xff] %vm113, %v111
  %115 = vst.msk [vmem:[#allocation2 + $0x8] sm:$0xff] %vm113, %v112
  // Predicated region
  $region18: #{encoder_layer_forward.10} parent=0 // pred_check
    %p116 = pneg %p14
  $region19: #{encoder_layer_forward.10} parent=0 // pred_check_branch
    %118 = sbr.rel (%p116) target = $region21
  $region20: #{encoder_layer_forward.10} parent=0 // pred_region
    %v119 = vld [vmem:[#allocation2] sm:$0xff]
    %v120 = vld [vmem:[#allocation2 + $0x8] sm:$0xff]
    %v121 = vld [vmem:[%s2] sm:$0x1]
    %v123 = vlaneseq
    %v124 = vshrl.u32 %v123, 7
    %v125 = vsub.s32 0, %v124
    %v126 = vrot.slane %v121, %v125
    %v128 = vadd.f32 %v119, %v126
    %v129 = vadd.f32 %v120, %v126
    %v130 = vmax.f32 %v128, 0.0
    %v131 = vmax.f32 %v129, 0.0
    %132 = vst.msk [vmem:[%s3] sm:$0xff] %vm113, %v130
    %133 = vst.msk [vmem:[%s3 + $0x8] sm:$0xff] %vm113, %v131
  $region21: #{encoder_layer_forward.10} parent=0 // pred_fallthru
    _
  // Predicated region
  $region22: #{encoder_layer_forward.10} parent=0 // pred_check
    _
  $region23: #{encoder_layer_forward.10} parent=0 // pred_check_branch
    %135 = sbr.rel (0) target = $region25
  $region24: #{encoder_layer_forward.10} parent=0 // pred_region
    _
  $region25: #{encoder_layer_forward.10} parent=0 // pred_fallthru
    _
  // Predicated region
  $region26: #{encoder_layer_forward.10} parent=0 // pred_check
    _
  $region27: #{encoder_layer_forward.10} parent=0 // pred_check_branch
    %137 = sbr.rel (0) target = $region29
  $region28: #{encoder_layer_forward.10} parent=0 // pred_region
    _
  $region29: #{encoder_layer_forward.10} parent=0 // pred_fallthru
    _

// kernel: encoder_layer_forward.11
$region0: #{encoder_layer_forward.11}
  #allocation0 [shape = 'u32[]', space=smem, size = 0x4, offset = 0x4, fixed_abs, tag = 'smem constant byte address 0x4 - core index']
  #allocation1 [shape = 'u32[144,128]{1,0:T(1,128)}', space=vmem, size = 0x12000, scoped, tag = 'internal scratch']
  #allocation2 [shape = 'f32[16,32]{1,0:T(8,128)}', space=vmem, size = 0x2000, scoped, tag = 'scratch operand']
  %s0 = inlined_call_operand.vmem [shape: f32[16,64], index: 0, kind: input, shape index: {}]
  %s1 = inlined_call_operand.vmem [shape: f32[64,32], index: 1, kind: input, shape index: {}]
  %s2 = inlined_call_operand.vmem [shape: f32[1,32], index: 2, kind: input, shape index: {}]
  %s3 = inlined_call_operand.vmem [shape: f32[16,32], index: 3, kind: input, shape index: {}]
  %s4 = inlined_call_operand.hbm [shape: f32[16,32], index: 4, kind: output, shape index: {}]
  %s5 = sld [smem:[#allocation0]]
  $region34: #{encoder_layer_forward.11} parent=0
    _
  %s7 = ssub.s32 1, %s5
  %s8 = scalar_select 0, %s7, %s5
  $region1: #{encoder_layer_forward.11} parent=0
    #allocation3 [shape = 'u8[8192]{0}', space=vmem, size = 0x2000, scoped, tag = 'output window, operand 0, single buffered']
    #allocation4 [shape = 's32[1]{0}', space=sflag, size = 0x4, scoped, tag = 'scoped memory for encoder_layer_forward.11']
    %9 = vsyncpa [#allocation4], 0
    // Predicated region
    $region2: #{encoder_layer_forward.11} parent=1 // pred_check
      _
    $region3: #{encoder_layer_forward.11} parent=1 // pred_check_branch
      %11 = sbr.rel (0) target = $region5
    $region4: #{encoder_layer_forward.11} parent=1 // pred_region
      _
    $region5: #{encoder_layer_forward.11} parent=1 // pred_fallthru
      _
    // Predicated region
    $region6: #{encoder_layer_forward.11} parent=1 // pred_check
      _
    $region7: #{encoder_layer_forward.11} parent=1 // pred_check_branch
      %13 = sbr.rel (0) target = $region9
    $region8: #{encoder_layer_forward.11} parent=1 // pred_region
      _
    $region9: #{encoder_layer_forward.11} parent=1 // pred_fallthru
      _
    // Predicated region
    $region10: #{encoder_layer_forward.11} parent=1 // pred_check
      _
    $region11: #{encoder_layer_forward.11} parent=1 // pred_check_branch
      %15 = sbr.rel (0) target = $region13
    $region12: #{encoder_layer_forward.11} parent=1 // pred_region
      _
    $region13: #{encoder_layer_forward.11} parent=1 // pred_fallthru
      _
    // Predicated region
    $region14: #{encoder_layer_forward.11} parent=1 // pred_check
      _
    $region15: #{encoder_layer_forward.11} parent=1 // pred_check_branch
      %17 = sbr.rel (0) target = $region17
    $region16: #{encoder_layer_forward.11} parent=1 // pred_region
      _
    $region17: #{encoder_layer_forward.11} parent=1 // pred_fallthru
      _
    %p18 = scmp.eq.s32.totalorder 0, 0
    // Predicated region
    $region18: #{encoder_layer_forward.11} parent=1 // pred_check
      %p19 = pneg %p18
    $region19: #{encoder_layer_forward.11} parent=1 // pred_check_branch
      %21 = sbr.rel (%p19) target = $region21
    $region20: #{encoder_layer_forward.11} parent=1 // pred_region
      %vm22 = vcmask 261120
      %23 = vst.msk [vmem:[#allocation2] sm:$0xff] %vm22, 0.0
      %24 = vst.msk [vmem:[#allocation2 + $0x8] sm:$0xff] %vm22, 0.0
    $region21: #{encoder_layer_forward.11} parent=1 // pred_fallthru
      _
    %v25 = vld [vmem:[%s0] sm:$0xff]
    %v26 = vld [vmem:[%s0 + $0x8] sm:$0xff]
    %v27 = vld [vmem:[%s1] sm:$0xff]
    %v28 = vld [vmem:[%s1 + $0x8] sm:$0xff]
    %v29 = vld [vmem:[%s1 + $0x10] sm:$0xff]
    %v30 = vld [vmem:[%s1 + $0x18] sm:$0xff]
    %v31 = vld [vmem:[%s1 + $0x20] sm:$0xff]
    %v32 = vld [vmem:[%s1 + $0x28] sm:$0xff]
    %v33 = vld [vmem:[%s1 + $0x30] sm:$0xff]
    %v34 = vld [vmem:[%s1 + $0x38] sm:$0xff]
    %v35 = vld [vmem:[#allocation2] sm:$0xff]
    %v36 = vld [vmem:[#allocation2 + $0x8] sm:$0xff]
    %vm37 = vcmask 523264
    %v39 = vsel %vm37, %v25, 0
    %v42 = vsel %vm37, %v26, 0
    %44 = vmatprep.subr.mxu0 0.0
    %45 = vmatpush1.msra.mxu0 0.0
    %46 = vmatprep.subr.mxu0 0.0
    %47 = vmatpush1.msra.mxu0 0.0
    %48 = vmatprep.subr.mxu0 0.0
    %49 = vmatpush1.msra.mxu0 0.0
    %50 = vmatprep.subr.mxu0 0.0
    %51 = vmatpush1.msra.mxu0 0.0
    %52 = vmatprep.subr.mxu0 0.0
    %53 = vmatpush1.msra.mxu0 0.0
    %54 = vmatprep.subr.mxu0 0.0
    %55 = vmatpush1.msra.mxu0 0.0
    %56 = vmatprep.subr.mxu0 0.0
    %57 = vmatpush1.msra.mxu0 0.0
    %58 = vmatprep.subr.mxu0 0.0
    %59 = vmatpush1.msra.mxu0 0.0
    %60 = vmatprep.subr.mxu0 0.0
    %61 = vmatpush1.msra.mxu0 %v34
    %62 = vmatprep.subr.mxu0 0.0
    %63 = vmatpush1.msra.mxu0 %v33
    %64 = vmatprep.subr.mxu0 0.0
    %65 = vmatpush1.msra.mxu0 %v32
    %66 = vmatprep.subr.mxu0 0.0
    %67 = vmatpush1.msra.mxu0 %v31
    %68 = vmatprep.subr.mxu0 0.0
    %69 = vmatpush1.msra.mxu0 %v30
    %70 = vmatprep.subr.mxu0 0.0
    %71 = vmatpush1.msra.mxu0 %v29
    %72 = vmatprep.subr.mxu0 0.0
    %73 = vmatpush1.msra.mxu0 %v28
    %74 = vmatprep.subr.mxu0 0.0
    %75 = vmatpush1.msra.mxu0 %v27
    %76 = vmatprep.subr.mxu0 0.0
    %77 = vmatpush2.msra.mxu0 0.0
    %78 = vmatprep.subr.mxu0 0.0
    %79 = vmatpush2.msra.mxu0 0.0
    %80 = vmatprep.subr.mxu0 0.0
    %81 = vmatpush2.msra.mxu0 0.0
    %82 = vmatprep.subr.mxu0 0.0
    %83 = vmatpush2.msra.mxu0 0.0
    %84 = vmatprep.subr.mxu0 0.0
    %85 = vmatpush2.msra.mxu0 0.0
    %86 = vmatprep.subr.mxu0 0.0
    %87 = vmatpush2.msra.mxu0 0.0
    %88 = vmatprep.subr.mxu0 0.0
    %89 = vmatpush2.msra.mxu0 0.0
    %90 = vmatprep.subr.mxu0 0.0
    %91 = vmatpush2.msra.mxu0 0.0
    %92 = vmatprep.subr.mxu0 0.0
    %93 = vmatpush2.msra.mxu0 0.0
    %94 = vmatprep.subr.mxu0 0.0
    %95 = vmatpush2.msra.mxu0 0.0
    %96 = vmatprep.subr.mxu0 0.0
    %97 = vmatpush2.msra.mxu0 0.0
    %98 = vmatprep.subr.mxu0 0.0
    %99 = vmatpush2.msra.mxu0 0.0
    %100 = vmatprep.subr.mxu0 0.0
    %101 = vmatpush2.msra.mxu0 0.0
    %102 = vmatprep.subr.mxu0 0.0
    %103 = vmatpush2.msra.mxu0 0.0
    %104 = vmatprep.subr.mxu0 0.0
    %105 = vmatpush2.msra.mxu0 0.0
    %106 = vmatprep.subr.mxu0 0.0
    %107 = vmatpush2.msra.mxu0 0.0
    %108 = vmatprep.mubr.f32.mxu0 0.0
    %109 = vmatmul.mubr.f32.gmra.mxu0 %v39
    %v110 = vpop.f32.mrf.mxu0
    %v111 = vadd.f32 0.0, %v110
    %v112 = vpop.f32.mrf.mxu0
    %113 = vmatprep.mubr.f32.mxu0 0.0
    %114 = vmatmul.mubr.f32.gmra.mxu0 %v42
    %v115 = vpop.f32.mrf.mxu0
    %v116 = vadd.f32 0.0, %v115
    %v117 = vpop.f32.mrf.mxu0
    %118 = vdwg.mxu0
    %v119 = vadd.f32 %v35, %v111
    %v120 = vadd.f32 %v36, %v116
    %vm121 = vcmask 261120
    %122 = vst.msk [vmem:[#allocation2] sm:$0xff] %vm121, %v119
    %123 = vst.msk [vmem:[#allocation2 + $0x8] sm:$0xff] %vm121, %v120
    // Predicated region
    $region22: #{encoder_layer_forward.11} parent=1 // pred_check
      %p124 = pneg %p18
    $region23: #{encoder_layer_forward.11} parent=1 // pred_check_branch
      %126 = sbr.rel (%p124) target = $region25
    $region24: #{encoder_layer_forward.11} parent=1 // pred_region
      %v127 = vld [vmem:[#allocation2] sm:$0xff]
      %v128 = vld [vmem:[#allocation2 + $0x8] sm:$0xff]
      %v129 = vld [vmem:[%s2] sm:$0x1]
      %v131 = vlaneseq
      %v132 = vshrl.u32 %v131, 7
      %v133 = vsub.s32 0, %v132
      %v134 = vrot.slane %v129, %v133
      %v136 = vadd.f32 %v127, %v134
      %v137 = vadd.f32 %v128, %v134
      %v138 = vld [vmem:[%s3] sm:$0xff]
      %v139 = vld [vmem:[%s3 + $0x8] sm:$0xff]
      %v140 = vadd.f32 %v136, %v138
      %v141 = vadd.f32 %v137, %v139
      %142 = vst.msk [vmem:[#allocation3] sm:$0xff] %vm121, %v140
      %143 = vst.msk [vmem:[#allocation3 + $0x8] sm:$0xff] %vm121, %v141
    $region25: #{encoder_layer_forward.11} parent=1 // pred_fallthru
      _
    // Predicated region
    $region26: #{encoder_layer_forward.11} parent=1 // pred_check
      _
    $region27: #{encoder_layer_forward.11} parent=1 // pred_check_branch
      %145 = sbr.rel (0) target = $region29
    $region28: #{encoder_layer_forward.11} parent=1 // pred_region
      %s147 = ssub.s32 256, 256
      %148 = vsyncadd [#allocation4], %s147
      %s149 = sshll.u32 [#allocation3], 4
      %s150 = int_to_ptr.vmem [resolvable:$true] %s149
      %155 = dma.vmem_to_hbm [thread:$0]  %s150, 256, %s4, [#allocation4], 128, 128, 8
    $region29: #{encoder_layer_forward.11} parent=1 // pred_fallthru
      _
    // Predicated region
    $region30: #{encoder_layer_forward.11} parent=1 // pred_check
      _
    $region31: #{encoder_layer_forward.11} parent=1 // pred_check_branch
      %157 = sbr.rel (0) target = $region33
    $region32: #{encoder_layer_forward.11} parent=1 // pred_region
      %158 = dma.done [#allocation4], 256
    $region33: #{encoder_layer_forward.11} parent=1 // pred_fallthru
      _
    %159 = vsyncpa [#allocation4], 1

</llo_original>
